<compile_context>
chip_gen: v7x
topology: tpu7x:2x2x1
jax: 0.10.0
libtpu: 0.0.40
codegen_flags: <defaults>
</compile_context>

<pallas_src>
import numpy as np
import jax
import jax.numpy as jnp
from jax import lax
from jax.experimental import pallas as pl
from jax.experimental.pallas import tpu as pltpu

# ---- layout constants -------------------------------------------------------
K = 5            # conv kernel size
IMG = 32         # input image height/width
NTAP = K * K     # 25
L1 = 1024        # conv1 wide width, valid p = 32*i + j     (i, j < 28)
M1 = 960         # pool1 wide width, valid q = 64*i + 2*j   (i, j < 14)
L2 = 640         # conv2 wide width, valid p = 64*i + 2*j   (i, j < 10)
T2 = 544         # pool2 wide width, valid t = 128*i + 4*j  (i, j < 5)

# ---- parameter-slab row offsets (all block starts are multiples of 8) -------
_R_W1 = 0      # (8, 32)   conv1 weights; col 25 = conv1 bias (ones row in xcol)
_R_B2 = 8      # (16, 1)   conv2 bias column (lane 0)
_R_FB1 = 24    # (1, 128)  fc1 bias (120 -> 128)
_R_FB2 = 32    # (1, 128)  fc2 bias (84 -> 128)
_R_FB3 = 40    # (1, 128)  fc3 bias (10 -> 128)
_R_F1 = 48     # 25 x (16, 128) fc1 per-spatial-position slabs
_R_F2 = 448    # (128, 128) fc2 weights (120 -> 128 in, 84 -> 128 out)
_R_F3 = 576    # (128, 128) fc3 weights (84 -> 128 in, 10 -> 128 out)
_R_TOTAL = 704


# ---- the single fused kernel ------------------------------------------------
def _lenet_kernel(xcol_ref, w2s_ref, p_ref, o_ref):
    # conv1 (1->6, k=5) + ReLU: ONE MXU dot over the wrapper-built im2col slab.
    # xcol row tap (= 5*di+dj) is the flat image shifted by 32*di+dj; row 25 is
    # all ones, so the bias lives in weight column 25.
    w1 = p_ref[_R_W1:_R_W1 + 8, :][:, 0:32]                              # (8, 32)
    a1 = jnp.dot(w1, xcol_ref[...], preferred_element_type=jnp.float32)  # (8, L1)
    a1 = jnp.maximum(a1, 0.0)

    # pool1: 2x2/2 max = elementwise max of 4 lane-shifted slices (in-register).
    m1 = jnp.maximum(jnp.maximum(a1[:, 0:M1], a1[:, 1:M1 + 1]),
                     jnp.maximum(a1[:, 32:M1 + 32], a1[:, 33:M1 + 33]))  # (8, M1)

    # conv2 (6->16, k=5) + ReLU: stack the 25 taps along the contraction dim
    # (8 sublane-aligned rows per tap) and run ONE deep-K MXU dot.
    taps = [m1[:, (64 * di + 2 * dj):(64 * di + 2 * dj) + L2]
            for di in range(K) for dj in range(K)]
    m1stack = jnp.concatenate(taps, axis=0)                              # (200, L2)
    b2 = p_ref[_R_B2:_R_B2 + 16, :][:, 0:1]                              # (16, 1)
    a2 = jnp.dot(w2s_ref[...], m1stack,
                 preferred_element_type=jnp.float32) + b2                # (16, L2)
    a2 = jnp.maximum(a2, 0.0)

    # pool2.
    m2 = jnp.maximum(jnp.maximum(a2[:, 0:T2], a2[:, 2:T2 + 2]),
                     jnp.maximum(a2[:, 64:T2 + 64], a2[:, 66:T2 + 66]))  # (16, T2)

    # fc1 + ReLU: PyTorch's (C,5,5) flatten folded into 25 per-position (16,128)
    # weight slabs; accumulate a single (1,128) row.
    h1 = p_ref[_R_FB1:_R_FB1 + 1, :]                                     # (1, 128)
    for tap in range(NTAP):
        i3, j3 = tap // 5, tap % 5
        t = 128 * i3 + 4 * j3
        col = m2[:, t:t + 1]                                             # (16, 1)
        f1t = p_ref[_R_F1 + 16 * tap:_R_F1 + 16 * tap + 16, :]           # (16, 128)
        h1 = h1 + jnp.sum(col * f1t, axis=0, keepdims=True)
    h1 = jnp.maximum(h1, 0.0)                                            # (1, 128)

    # fc2 + ReLU, fc3 (128-padded; zero pads are exact no-ops).  Lane-dense store.
    h2 = jnp.dot(h1, p_ref[_R_F2:_R_F2 + 128, :],
                 preferred_element_type=jnp.float32) + p_ref[_R_FB2:_R_FB2 + 1, :]
    h2 = jnp.maximum(h2, 0.0)                                            # (1, 128)
    out = jnp.dot(h2, p_ref[_R_F3:_R_F3 + 128, :],
                  preferred_element_type=jnp.float32) + p_ref[_R_FB3:_R_FB3 + 1, :]
    o_ref[...] = out                                                     # (1, 128)


# ---- per-call image prep (inside jit) ----------------------------------------
def _im2col(x):
    """(1,1,32,32) -> (32, L1) conv1 im2col slab: rows 0..24 = image shifted by
    32*di+dj (tap = 5*di+dj), row 25 = ones (bias), rows 26..31 = zero."""
    xflat = jnp.pad(x.reshape(IMG * IMG).astype(jnp.float32), (0, 4 * IMG + 4))
    rows = [xflat[32 * di + dj: 32 * di + dj + L1]
            for di in range(K) for dj in range(K)]
    rows.append(jnp.ones((L1,), jnp.float32))
    xcol = jnp.stack(rows, axis=0)                                       # (26, L1)
    return jnp.pad(xcol, ((0, 32 - 26), (0, 0)))                         # (32, L1)


def net_forward(x, w2s, pslab):
    """x: (1, 1, 32, 32) NCHW float32 (batch must be 1, as in the reference module).
    w2s, pslab: pre-packed params from pack_params (built once, outside jit)."""
    xcol = _im2col(x)
    vmem = pl.BlockSpec(memory_space=pltpu.MemorySpace.VMEM)
    out = pl.pallas_call(
        _lenet_kernel,
        out_shape=jax.ShapeDtypeStruct((1, 128), jnp.float32),
        in_specs=[vmem, vmem, vmem],
        out_specs=vmem,
        cost_estimate=pl.CostEstimate(flops=4_800_000, transcendentals=0,
                                      bytes_accessed=510_000),
    )(xcol, w2s, pslab)
    return out[:, :10]


# ---- one-time parameter re-layout (numpy, OUTSIDE the jit path) --------------
def pack_params(params):
    (c1w, c1b, c2w, c2b, f1w, f1b, f2w, f2b, f3w, f3b) = map(np.asarray, params)

    # conv2 weights stacked along the contraction dim: column k = 8*tap + ci.
    w2s = np.pad(c2w.transpose(0, 2, 3, 1),                 # (co, di, dj, ci)
                 ((0, 0), (0, 0), (0, 0), (0, 2))).reshape(16, 200).astype(np.float32)

    slab = np.zeros((_R_TOTAL, 128), np.float32)
    slab[_R_W1:_R_W1 + 6, 0:25] = c1w.reshape(6, 25)        # [c, 5*di+dj]
    slab[_R_W1:_R_W1 + 6, 25] = c1b                         # bias column
    slab[_R_B2:_R_B2 + 16, 0] = c2b
    slab[_R_FB1, 0:120] = f1b
    slab[_R_FB2, 0:84] = f2b
    slab[_R_FB3, 0:10] = f3b
    f1r = f1w.reshape(16, 25, 120)                          # [ci, tap, out]
    for tap in range(NTAP):
        slab[_R_F1 + 16 * tap:_R_F1 + 16 * tap + 16, 0:120] = f1r[:, tap, :]
    slab[_R_F2:_R_F2 + 120, 0:84] = f2w
    slab[_R_F3:_R_F3 + 84, 0:10] = f3w
    return jnp.asarray(w2s), jnp.asarray(slab)


# ---- pure-JAX reference (for correctness check) ------------------------------
def net_reference(x, params):
    (c1w, c1b, c2w, c2b, f1w, f1b, f2w, f2b, f3w, f3b) = params
    dn = ('NCHW', 'OIHW', 'NCHW')
    y = lax.conv_general_dilated(x, c1w, (1, 1), 'VALID', dimension_numbers=dn)
    y = jnp.maximum(y + c1b.reshape(1, -1, 1, 1), 0.0)
    y = lax.reduce_window(y, -jnp.inf, lax.max, (1, 1, 2, 2), (1, 1, 2, 2), 'VALID')
    y = lax.conv_general_dilated(y, c2w, (1, 1), 'VALID', dimension_numbers=dn)
    y = jnp.maximum(y + c2b.reshape(1, -1, 1, 1), 0.0)
    y = lax.reduce_window(y, -jnp.inf, lax.max, (1, 1, 2, 2), (1, 1, 2, 2), 'VALID')
    flat = y.reshape(1, -1)                              # (1, 400) in (C, H, W) order
    h = jnp.maximum(flat @ f1w + f1b, 0.0)
    h = jnp.maximum(h @ f2w + f2b, 0.0)
    return h @ f3w + f3b


# ---- params -----------------------------------------------------------------
def init_params(key):
    ks = jax.random.split(key, 10)
    s = 0.1
    conv1_w = jax.random.normal(ks[0], (6, 1, 5, 5), jnp.float32) * s
    conv1_b = jax.random.normal(ks[1], (6,), jnp.float32) * s
    conv2_w = jax.random.normal(ks[2], (16, 6, 5, 5), jnp.float32) * s
    conv2_b = jax.random.normal(ks[3], (16,), jnp.float32) * s
    # FC weights stored as (in_features, out_features) = PyTorch weight.T
    fc1_w = jax.random.normal(ks[4], (16 * 5 * 5, 120), jnp.float32) * s
    fc1_b = jax.random.normal(ks[5], (120,), jnp.float32) * s
    fc2_w = jax.random.normal(ks[6], (120, 84), jnp.float32) * s
    fc2_b = jax.random.normal(ks[7], (84,), jnp.float32) * s
    fc3_w = jax.random.normal(ks[8], (84, 10), jnp.float32) * s
    fc3_b = jax.random.normal(ks[9], (10,), jnp.float32) * s
    return (conv1_w, conv1_b, conv2_w, conv2_b,
            fc1_w, fc1_b, fc2_w, fc2_b, fc3_w, fc3_b)


if __name__ == "__main__":
    key = jax.random.PRNGKey(0)
    k_param, k_x = jax.random.split(key)
    params = init_params(k_param)
    x = jax.random.normal(k_x, (1, 1, 32, 32), jnp.float32)

    # Parameter re-layout happens exactly once, outside the per-call jit path.
    w2s, pslab = pack_params(params)

    fwd = jax.jit(net_forward)
    out = fwd(x, w2s, pslab)
    jax.block_until_ready(out)
    assert out.shape == (1, 10) and out.dtype == jnp.float32

    ref = jax.jit(net_reference)(x, params)
    jax.block_until_ready(ref)
    # 1e-3 tolerance: conv/fc now run on the MXU at default matmul precision.
    err = float(np.max(np.abs(np.asarray(out) - np.asarray(ref))))
    assert np.allclose(np.asarray(out), np.asarray(ref), rtol=1e-3, atol=1e-3), err
    print("KERNEL_OK")
</pallas_src>

<mosaic_0001>
module attributes {stable_mosaic.version = 11 : i64} {
  func.func @_lenet_kernel(%arg0: memref<32x1024xf32, #tpu.memory_space<vmem>>, %arg1: memref<16x200xf32, #tpu.memory_space<vmem>>, %arg2: memref<704x128xf32, #tpu.memory_space<vmem>>, %arg3: memref<1x128xf32, #tpu.memory_space<vmem>>) attributes {dimension_semantics = [], scalar_prefetch = 0 : i64, scratch_operands = 0 : i64, tpu.core_type = #tpu.core_type<tc>} {
    %c0 = arith.constant 0 : index
    %c0_0 = arith.constant 0 : index
    %0 = vector.load %arg2[%c0, %c0_0] : memref<704x128xf32, #tpu.memory_space<vmem>>, vector<8x128xf32>
    %1 = vector.extract_strided_slice %0 {offsets = [0, 0], sizes = [8, 32], strides = [1, 1]} : vector<8x128xf32> to vector<8x32xf32>
    %c0_1 = arith.constant 0 : index
    %c0_2 = arith.constant 0 : index
    %2 = vector.load %arg0[%c0_1, %c0_2] : memref<32x1024xf32, #tpu.memory_space<vmem>>, vector<32x1024xf32>
    %cst = arith.constant dense<0.000000e+00> : vector<8x1024xf32>
    %3 = tpu.matmul %1, %2, %cst {dimension_numbers = #tpu.dot_dimension_numbers<[1], [0], [0], [1], [0, 0, 1, 1], [], []>} : vector<8x32xf32>, vector<32x1024xf32>, vector<8x1024xf32> -> vector<8x1024xf32>
    %cst_3 = arith.constant 0.000000e+00 : f32
    %4 = vector.broadcast %cst_3 : f32 to vector<8x1024xf32>
    %5 = arith.maximumf %3, %4 : vector<8x1024xf32>
    %6 = vector.extract_strided_slice %5 {offsets = [0, 0], sizes = [8, 960], strides = [1, 1]} : vector<8x1024xf32> to vector<8x960xf32>
    %7 = vector.extract_strided_slice %5 {offsets = [0, 1], sizes = [8, 960], strides = [1, 1]} : vector<8x1024xf32> to vector<8x960xf32>
    %8 = arith.maximumf %6, %7 : vector<8x960xf32>
    %9 = vector.extract_strided_slice %5 {offsets = [0, 32], sizes = [8, 960], strides = [1, 1]} : vector<8x1024xf32> to vector<8x960xf32>
    %10 = vector.extract_strided_slice %5 {offsets = [0, 33], sizes = [8, 960], strides = [1, 1]} : vector<8x1024xf32> to vector<8x960xf32>
    %11 = arith.maximumf %9, %10 : vector<8x960xf32>
    %12 = arith.maximumf %8, %11 : vector<8x960xf32>
    %13 = vector.extract_strided_slice %12 {offsets = [0, 0], sizes = [8, 640], strides = [1, 1]} : vector<8x960xf32> to vector<8x640xf32>
    %14 = vector.extract_strided_slice %12 {offsets = [0, 2], sizes = [8, 640], strides = [1, 1]} : vector<8x960xf32> to vector<8x640xf32>
    %15 = vector.extract_strided_slice %12 {offsets = [0, 4], sizes = [8, 640], strides = [1, 1]} : vector<8x960xf32> to vector<8x640xf32>
    %16 = vector.extract_strided_slice %12 {offsets = [0, 6], sizes = [8, 640], strides = [1, 1]} : vector<8x960xf32> to vector<8x640xf32>
    %17 = vector.extract_strided_slice %12 {offsets = [0, 8], sizes = [8, 640], strides = [1, 1]} : vector<8x960xf32> to vector<8x640xf32>
    %18 = vector.extract_strided_slice %12 {offsets = [0, 64], sizes = [8, 640], strides = [1, 1]} : vector<8x960xf32> to vector<8x640xf32>
    %19 = vector.extract_strided_slice %12 {offsets = [0, 66], sizes = [8, 640], strides = [1, 1]} : vector<8x960xf32> to vector<8x640xf32>
    %20 = vector.extract_strided_slice %12 {offsets = [0, 68], sizes = [8, 640], strides = [1, 1]} : vector<8x960xf32> to vector<8x640xf32>
    %21 = vector.extract_strided_slice %12 {offsets = [0, 70], sizes = [8, 640], strides = [1, 1]} : vector<8x960xf32> to vector<8x640xf32>
    %22 = vector.extract_strided_slice %12 {offsets = [0, 72], sizes = [8, 640], strides = [1, 1]} : vector<8x960xf32> to vector<8x640xf32>
    %23 = vector.extract_strided_slice %12 {offsets = [0, 128], sizes = [8, 640], strides = [1, 1]} : vector<8x960xf32> to vector<8x640xf32>
    %24 = vector.extract_strided_slice %12 {offsets = [0, 130], sizes = [8, 640], strides = [1, 1]} : vector<8x960xf32> to vector<8x640xf32>
    %25 = vector.extract_strided_slice %12 {offsets = [0, 132], sizes = [8, 640], strides = [1, 1]} : vector<8x960xf32> to vector<8x640xf32>
    %26 = vector.extract_strided_slice %12 {offsets = [0, 134], sizes = [8, 640], strides = [1, 1]} : vector<8x960xf32> to vector<8x640xf32>
    %27 = vector.extract_strided_slice %12 {offsets = [0, 136], sizes = [8, 640], strides = [1, 1]} : vector<8x960xf32> to vector<8x640xf32>
    %28 = vector.extract_strided_slice %12 {offsets = [0, 192], sizes = [8, 640], strides = [1, 1]} : vector<8x960xf32> to vector<8x640xf32>
    %29 = vector.extract_strided_slice %12 {offsets = [0, 194], sizes = [8, 640], strides = [1, 1]} : vector<8x960xf32> to vector<8x640xf32>
    %30 = vector.extract_strided_slice %12 {offsets = [0, 196], sizes = [8, 640], strides = [1, 1]} : vector<8x960xf32> to vector<8x640xf32>
    %31 = vector.extract_strided_slice %12 {offsets = [0, 198], sizes = [8, 640], strides = [1, 1]} : vector<8x960xf32> to vector<8x640xf32>
    %32 = vector.extract_strided_slice %12 {offsets = [0, 200], sizes = [8, 640], strides = [1, 1]} : vector<8x960xf32> to vector<8x640xf32>
    %33 = vector.extract_strided_slice %12 {offsets = [0, 256], sizes = [8, 640], strides = [1, 1]} : vector<8x960xf32> to vector<8x640xf32>
    %34 = vector.extract_strided_slice %12 {offsets = [0, 258], sizes = [8, 640], strides = [1, 1]} : vector<8x960xf32> to vector<8x640xf32>
    %35 = vector.extract_strided_slice %12 {offsets = [0, 260], sizes = [8, 640], strides = [1, 1]} : vector<8x960xf32> to vector<8x640xf32>
    %36 = vector.extract_strided_slice %12 {offsets = [0, 262], sizes = [8, 640], strides = [1, 1]} : vector<8x960xf32> to vector<8x640xf32>
    %37 = vector.extract_strided_slice %12 {offsets = [0, 264], sizes = [8, 640], strides = [1, 1]} : vector<8x960xf32> to vector<8x640xf32>
    %38 = tpu.concatenate %13, %14, %15, %16, %17, %18, %19, %20, %21, %22, %23, %24, %25, %26, %27, %28 in 0 : vector<8x640xf32>, vector<8x640xf32>, vector<8x640xf32>, vector<8x640xf32>, vector<8x640xf32>, vector<8x640xf32>, vector<8x640xf32>, vector<8x640xf32>, vector<8x640xf32>, vector<8x640xf32>, vector<8x640xf32>, vector<8x640xf32>, vector<8x640xf32>, vector<8x640xf32>, vector<8x640xf32>, vector<8x640xf32> -> vector<128x640xf32>
    %39 = tpu.concatenate %29, %30, %31, %32, %33, %34, %35, %36, %37 in 0 : vector<8x640xf32>, vector<8x640xf32>, vector<8x640xf32>, vector<8x640xf32>, vector<8x640xf32>, vector<8x640xf32>, vector<8x640xf32>, vector<8x640xf32>, vector<8x640xf32> -> vector<72x640xf32>
    %40 = tpu.concatenate %38, %39 in 0 : vector<128x640xf32>, vector<72x640xf32> -> vector<200x640xf32>
    %c8 = arith.constant 8 : index
    %c0_4 = arith.constant 0 : index
    %41 = vector.load %arg2[%c8, %c0_4] : memref<704x128xf32, #tpu.memory_space<vmem>>, vector<16x128xf32>
    %42 = vector.extract_strided_slice %41 {offsets = [0, 0], sizes = [16, 1], strides = [1, 1]} : vector<16x128xf32> to vector<16x1xf32>
    %c0_5 = arith.constant 0 : index
    %c0_6 = arith.constant 0 : index
    %43 = vector.load %arg1[%c0_5, %c0_6] : memref<16x200xf32, #tpu.memory_space<vmem>>, vector<16x200xf32>
    %cst_7 = arith.constant dense<0.000000e+00> : vector<16x640xf32>
    %44 = tpu.matmul %43, %40, %cst_7 {dimension_numbers = #tpu.dot_dimension_numbers<[1], [0], [0], [1], [0, 0, 1, 1], [], []>} : vector<16x200xf32>, vector<200x640xf32>, vector<16x640xf32> -> vector<16x640xf32>
    %45 = vector.broadcast %42 : vector<16x1xf32> to vector<16x640xf32>
    %46 = arith.addf %44, %45 : vector<16x640xf32>
    %cst_8 = arith.constant 0.000000e+00 : f32
    %47 = vector.broadcast %cst_8 : f32 to vector<16x640xf32>
    %48 = arith.maximumf %46, %47 : vector<16x640xf32>
    %49 = vector.extract_strided_slice %48 {offsets = [0, 0], sizes = [16, 544], strides = [1, 1]} : vector<16x640xf32> to vector<16x544xf32>
    %50 = vector.extract_strided_slice %48 {offsets = [0, 2], sizes = [16, 544], strides = [1, 1]} : vector<16x640xf32> to vector<16x544xf32>
    %51 = arith.maximumf %49, %50 : vector<16x544xf32>
    %52 = vector.extract_strided_slice %48 {offsets = [0, 64], sizes = [16, 544], strides = [1, 1]} : vector<16x640xf32> to vector<16x544xf32>
    %53 = vector.extract_strided_slice %48 {offsets = [0, 66], sizes = [16, 544], strides = [1, 1]} : vector<16x640xf32> to vector<16x544xf32>
    %54 = arith.maximumf %52, %53 : vector<16x544xf32>
    %55 = arith.maximumf %51, %54 : vector<16x544xf32>
    %c24 = arith.constant 24 : index
    %c0_9 = arith.constant 0 : index
    %56 = vector.load %arg2[%c24, %c0_9] : memref<704x128xf32, #tpu.memory_space<vmem>>, vector<1x128xf32>
    %57 = vector.extract_strided_slice %55 {offsets = [0, 0], sizes = [16, 1], strides = [1, 1]} : vector<16x544xf32> to vector<16x1xf32>
    %c48 = arith.constant 48 : index
    %c0_10 = arith.constant 0 : index
    %58 = vector.load %arg2[%c48, %c0_10] : memref<704x128xf32, #tpu.memory_space<vmem>>, vector<16x128xf32>
    %59 = vector.broadcast %57 : vector<16x1xf32> to vector<16x128xf32>
    %60 = arith.mulf %59, %58 : vector<16x128xf32>
    %cst_11 = arith.constant dense<0.000000e+00> : vector<128xf32>
    %61 = vector.multi_reduction <add>, %60, %cst_11 [0] : vector<16x128xf32> to vector<128xf32>
    %62 = vector.shape_cast %61 : vector<128xf32> to vector<1x128xf32>
    %63 = arith.addf %56, %62 : vector<1x128xf32>
    %64 = vector.extract_strided_slice %55 {offsets = [0, 4], sizes = [16, 1], strides = [1, 1]} : vector<16x544xf32> to vector<16x1xf32>
    %c64 = arith.constant 64 : index
    %c0_12 = arith.constant 0 : index
    %65 = vector.load %arg2[%c64, %c0_12] : memref<704x128xf32, #tpu.memory_space<vmem>>, vector<16x128xf32>
    %66 = vector.broadcast %64 : vector<16x1xf32> to vector<16x128xf32>
    %67 = arith.mulf %66, %65 : vector<16x128xf32>
    %cst_13 = arith.constant dense<0.000000e+00> : vector<128xf32>
    %68 = vector.multi_reduction <add>, %67, %cst_13 [0] : vector<16x128xf32> to vector<128xf32>
    %69 = vector.shape_cast %68 : vector<128xf32> to vector<1x128xf32>
    %70 = arith.addf %63, %69 : vector<1x128xf32>
    %71 = vector.extract_strided_slice %55 {offsets = [0, 8], sizes = [16, 1], strides = [1, 1]} : vector<16x544xf32> to vector<16x1xf32>
    %c80 = arith.constant 80 : index
    %c0_14 = arith.constant 0 : index
    %72 = vector.load %arg2[%c80, %c0_14] : memref<704x128xf32, #tpu.memory_space<vmem>>, vector<16x128xf32>
    %73 = vector.broadcast %71 : vector<16x1xf32> to vector<16x128xf32>
    %74 = arith.mulf %73, %72 : vector<16x128xf32>
    %cst_15 = arith.constant dense<0.000000e+00> : vector<128xf32>
    %75 = vector.multi_reduction <add>, %74, %cst_15 [0] : vector<16x128xf32> to vector<128xf32>
    %76 = vector.shape_cast %75 : vector<128xf32> to vector<1x128xf32>
    %77 = arith.addf %70, %76 : vector<1x128xf32>
    %78 = vector.extract_strided_slice %55 {offsets = [0, 12], sizes = [16, 1], strides = [1, 1]} : vector<16x544xf32> to vector<16x1xf32>
    %c96 = arith.constant 96 : index
    %c0_16 = arith.constant 0 : index
    %79 = vector.load %arg2[%c96, %c0_16] : memref<704x128xf32, #tpu.memory_space<vmem>>, vector<16x128xf32>
    %80 = vector.broadcast %78 : vector<16x1xf32> to vector<16x128xf32>
    %81 = arith.mulf %80, %79 : vector<16x128xf32>
    %cst_17 = arith.constant dense<0.000000e+00> : vector<128xf32>
    %82 = vector.multi_reduction <add>, %81, %cst_17 [0] : vector<16x128xf32> to vector<128xf32>
    %83 = vector.shape_cast %82 : vector<128xf32> to vector<1x128xf32>
    %84 = arith.addf %77, %83 : vector<1x128xf32>
    %85 = vector.extract_strided_slice %55 {offsets = [0, 16], sizes = [16, 1], strides = [1, 1]} : vector<16x544xf32> to vector<16x1xf32>
    %c112 = arith.constant 112 : index
    %c0_18 = arith.constant 0 : index
    %86 = vector.load %arg2[%c112, %c0_18] : memref<704x128xf32, #tpu.memory_space<vmem>>, vector<16x128xf32>
    %87 = vector.broadcast %85 : vector<16x1xf32> to vector<16x128xf32>
    %88 = arith.mulf %87, %86 : vector<16x128xf32>
    %cst_19 = arith.constant dense<0.000000e+00> : vector<128xf32>
    %89 = vector.multi_reduction <add>, %88, %cst_19 [0] : vector<16x128xf32> to vector<128xf32>
    %90 = vector.shape_cast %89 : vector<128xf32> to vector<1x128xf32>
    %91 = arith.addf %84, %90 : vector<1x128xf32>
    %92 = vector.extract_strided_slice %55 {offsets = [0, 128], sizes = [16, 1], strides = [1, 1]} : vector<16x544xf32> to vector<16x1xf32>
    %c128 = arith.constant 128 : index
    %c0_20 = arith.constant 0 : index
    %93 = vector.load %arg2[%c128, %c0_20] : memref<704x128xf32, #tpu.memory_space<vmem>>, vector<16x128xf32>
    %94 = vector.broadcast %92 : vector<16x1xf32> to vector<16x128xf32>
    %95 = arith.mulf %94, %93 : vector<16x128xf32>
    %cst_21 = arith.constant dense<0.000000e+00> : vector<128xf32>
    %96 = vector.multi_reduction <add>, %95, %cst_21 [0] : vector<16x128xf32> to vector<128xf32>
    %97 = vector.shape_cast %96 : vector<128xf32> to vector<1x128xf32>
    %98 = arith.addf %91, %97 : vector<1x128xf32>
    %99 = vector.extract_strided_slice %55 {offsets = [0, 132], sizes = [16, 1], strides = [1, 1]} : vector<16x544xf32> to vector<16x1xf32>
    %c144 = arith.constant 144 : index
    %c0_22 = arith.constant 0 : index
    %100 = vector.load %arg2[%c144, %c0_22] : memref<704x128xf32, #tpu.memory_space<vmem>>, vector<16x128xf32>
    %101 = vector.broadcast %99 : vector<16x1xf32> to vector<16x128xf32>
    %102 = arith.mulf %101, %100 : vector<16x128xf32>
    %cst_23 = arith.constant dense<0.000000e+00> : vector<128xf32>
    %103 = vector.multi_reduction <add>, %102, %cst_23 [0] : vector<16x128xf32> to vector<128xf32>
    %104 = vector.shape_cast %103 : vector<128xf32> to vector<1x128xf32>
    %105 = arith.addf %98, %104 : vector<1x128xf32>
    %106 = vector.extract_strided_slice %55 {offsets = [0, 136], sizes = [16, 1], strides = [1, 1]} : vector<16x544xf32> to vector<16x1xf32>
    %c160 = arith.constant 160 : index
    %c0_24 = arith.constant 0 : index
    %107 = vector.load %arg2[%c160, %c0_24] : memref<704x128xf32, #tpu.memory_space<vmem>>, vector<16x128xf32>
    %108 = vector.broadcast %106 : vector<16x1xf32> to vector<16x128xf32>
    %109 = arith.mulf %108, %107 : vector<16x128xf32>
    %cst_25 = arith.constant dense<0.000000e+00> : vector<128xf32>
    %110 = vector.multi_reduction <add>, %109, %cst_25 [0] : vector<16x128xf32> to vector<128xf32>
    %111 = vector.shape_cast %110 : vector<128xf32> to vector<1x128xf32>
    %112 = arith.addf %105, %111 : vector<1x128xf32>
    %113 = vector.extract_strided_slice %55 {offsets = [0, 140], sizes = [16, 1], strides = [1, 1]} : vector<16x544xf32> to vector<16x1xf32>
    %c176 = arith.constant 176 : index
    %c0_26 = arith.constant 0 : index
    %114 = vector.load %arg2[%c176, %c0_26] : memref<704x128xf32, #tpu.memory_space<vmem>>, vector<16x128xf32>
    %115 = vector.broadcast %113 : vector<16x1xf32> to vector<16x128xf32>
    %116 = arith.mulf %115, %114 : vector<16x128xf32>
    %cst_27 = arith.constant dense<0.000000e+00> : vector<128xf32>
    %117 = vector.multi_reduction <add>, %116, %cst_27 [0] : vector<16x128xf32> to vector<128xf32>
    %118 = vector.shape_cast %117 : vector<128xf32> to vector<1x128xf32>
    %119 = arith.addf %112, %118 : vector<1x128xf32>
    %120 = vector.extract_strided_slice %55 {offsets = [0, 144], sizes = [16, 1], strides = [1, 1]} : vector<16x544xf32> to vector<16x1xf32>
    %c192 = arith.constant 192 : index
    %c0_28 = arith.constant 0 : index
    %121 = vector.load %arg2[%c192, %c0_28] : memref<704x128xf32, #tpu.memory_space<vmem>>, vector<16x128xf32>
    %122 = vector.broadcast %120 : vector<16x1xf32> to vector<16x128xf32>
    %123 = arith.mulf %122, %121 : vector<16x128xf32>
    %cst_29 = arith.constant dense<0.000000e+00> : vector<128xf32>
    %124 = vector.multi_reduction <add>, %123, %cst_29 [0] : vector<16x128xf32> to vector<128xf32>
    %125 = vector.shape_cast %124 : vector<128xf32> to vector<1x128xf32>
    %126 = arith.addf %119, %125 : vector<1x128xf32>
    %127 = vector.extract_strided_slice %55 {offsets = [0, 256], sizes = [16, 1], strides = [1, 1]} : vector<16x544xf32> to vector<16x1xf32>
    %c208 = arith.constant 208 : index
    %c0_30 = arith.constant 0 : index
    %128 = vector.load %arg2[%c208, %c0_30] : memref<704x128xf32, #tpu.memory_space<vmem>>, vector<16x128xf32>
    %129 = vector.broadcast %127 : vector<16x1xf32> to vector<16x128xf32>
    %130 = arith.mulf %129, %128 : vector<16x128xf32>
    %cst_31 = arith.constant dense<0.000000e+00> : vector<128xf32>
    %131 = vector.multi_reduction <add>, %130, %cst_31 [0] : vector<16x128xf32> to vector<128xf32>
    %132 = vector.shape_cast %131 : vector<128xf32> to vector<1x128xf32>
    %133 = arith.addf %126, %132 : vector<1x128xf32>
    %134 = vector.extract_strided_slice %55 {offsets = [0, 260], sizes = [16, 1], strides = [1, 1]} : vector<16x544xf32> to vector<16x1xf32>
    %c224 = arith.constant 224 : index
    %c0_32 = arith.constant 0 : index
    %135 = vector.load %arg2[%c224, %c0_32] : memref<704x128xf32, #tpu.memory_space<vmem>>, vector<16x128xf32>
    %136 = vector.broadcast %134 : vector<16x1xf32> to vector<16x128xf32>
    %137 = arith.mulf %136, %135 : vector<16x128xf32>
    %cst_33 = arith.constant dense<0.000000e+00> : vector<128xf32>
    %138 = vector.multi_reduction <add>, %137, %cst_33 [0] : vector<16x128xf32> to vector<128xf32>
    %139 = vector.shape_cast %138 : vector<128xf32> to vector<1x128xf32>
    %140 = arith.addf %133, %139 : vector<1x128xf32>
    %141 = vector.extract_strided_slice %55 {offsets = [0, 264], sizes = [16, 1], strides = [1, 1]} : vector<16x544xf32> to vector<16x1xf32>
    %c240 = arith.constant 240 : index
    %c0_34 = arith.constant 0 : index
    %142 = vector.load %arg2[%c240, %c0_34] : memref<704x128xf32, #tpu.memory_space<vmem>>, vector<16x128xf32>
    %143 = vector.broadcast %141 : vector<16x1xf32> to vector<16x128xf32>
    %144 = arith.mulf %143, %142 : vector<16x128xf32>
    %cst_35 = arith.constant dense<0.000000e+00> : vector<128xf32>
    %145 = vector.multi_reduction <add>, %144, %cst_35 [0] : vector<16x128xf32> to vector<128xf32>
    %146 = vector.shape_cast %145 : vector<128xf32> to vector<1x128xf32>
    %147 = arith.addf %140, %146 : vector<1x128xf32>
    %148 = vector.extract_strided_slice %55 {offsets = [0, 268], sizes = [16, 1], strides = [1, 1]} : vector<16x544xf32> to vector<16x1xf32>
    %c256 = arith.constant 256 : index
    %c0_36 = arith.constant 0 : index
    %149 = vector.load %arg2[%c256, %c0_36] : memref<704x128xf32, #tpu.memory_space<vmem>>, vector<16x128xf32>
    %150 = vector.broadcast %148 : vector<16x1xf32> to vector<16x128xf32>
    %151 = arith.mulf %150, %149 : vector<16x128xf32>
    %cst_37 = arith.constant dense<0.000000e+00> : vector<128xf32>
    %152 = vector.multi_reduction <add>, %151, %cst_37 [0] : vector<16x128xf32> to vector<128xf32>
    %153 = vector.shape_cast %152 : vector<128xf32> to vector<1x128xf32>
    %154 = arith.addf %147, %153 : vector<1x128xf32>
    %155 = vector.extract_strided_slice %55 {offsets = [0, 272], sizes = [16, 1], strides = [1, 1]} : vector<16x544xf32> to vector<16x1xf32>
    %c272 = arith.constant 272 : index
    %c0_38 = arith.constant 0 : index
    %156 = vector.load %arg2[%c272, %c0_38] : memref<704x128xf32, #tpu.memory_space<vmem>>, vector<16x128xf32>
    %157 = vector.broadcast %155 : vector<16x1xf32> to vector<16x128xf32>
    %158 = arith.mulf %157, %156 : vector<16x128xf32>
    %cst_39 = arith.constant dense<0.000000e+00> : vector<128xf32>
    %159 = vector.multi_reduction <add>, %158, %cst_39 [0] : vector<16x128xf32> to vector<128xf32>
    %160 = vector.shape_cast %159 : vector<128xf32> to vector<1x128xf32>
    %161 = arith.addf %154, %160 : vector<1x128xf32>
    %162 = vector.extract_strided_slice %55 {offsets = [0, 384], sizes = [16, 1], strides = [1, 1]} : vector<16x544xf32> to vector<16x1xf32>
    %c288 = arith.constant 288 : index
    %c0_40 = arith.constant 0 : index
    %163 = vector.load %arg2[%c288, %c0_40] : memref<704x128xf32, #tpu.memory_space<vmem>>, vector<16x128xf32>
    %164 = vector.broadcast %162 : vector<16x1xf32> to vector<16x128xf32>
    %165 = arith.mulf %164, %163 : vector<16x128xf32>
    %cst_41 = arith.constant dense<0.000000e+00> : vector<128xf32>
    %166 = vector.multi_reduction <add>, %165, %cst_41 [0] : vector<16x128xf32> to vector<128xf32>
    %167 = vector.shape_cast %166 : vector<128xf32> to vector<1x128xf32>
    %168 = arith.addf %161, %167 : vector<1x128xf32>
    %169 = vector.extract_strided_slice %55 {offsets = [0, 388], sizes = [16, 1], strides = [1, 1]} : vector<16x544xf32> to vector<16x1xf32>
    %c304 = arith.constant 304 : index
    %c0_42 = arith.constant 0 : index
    %170 = vector.load %arg2[%c304, %c0_42] : memref<704x128xf32, #tpu.memory_space<vmem>>, vector<16x128xf32>
    %171 = vector.broadcast %169 : vector<16x1xf32> to vector<16x128xf32>
    %172 = arith.mulf %171, %170 : vector<16x128xf32>
    %cst_43 = arith.constant dense<0.000000e+00> : vector<128xf32>
    %173 = vector.multi_reduction <add>, %172, %cst_43 [0] : vector<16x128xf32> to vector<128xf32>
    %174 = vector.shape_cast %173 : vector<128xf32> to vector<1x128xf32>
    %175 = arith.addf %168, %174 : vector<1x128xf32>
    %176 = vector.extract_strided_slice %55 {offsets = [0, 392], sizes = [16, 1], strides = [1, 1]} : vector<16x544xf32> to vector<16x1xf32>
    %c320 = arith.constant 320 : index
    %c0_44 = arith.constant 0 : index
    %177 = vector.load %arg2[%c320, %c0_44] : memref<704x128xf32, #tpu.memory_space<vmem>>, vector<16x128xf32>
    %178 = vector.broadcast %176 : vector<16x1xf32> to vector<16x128xf32>
    %179 = arith.mulf %178, %177 : vector<16x128xf32>
    %cst_45 = arith.constant dense<0.000000e+00> : vector<128xf32>
    %180 = vector.multi_reduction <add>, %179, %cst_45 [0] : vector<16x128xf32> to vector<128xf32>
    %181 = vector.shape_cast %180 : vector<128xf32> to vector<1x128xf32>
    %182 = arith.addf %175, %181 : vector<1x128xf32>
    %183 = vector.extract_strided_slice %55 {offsets = [0, 396], sizes = [16, 1], strides = [1, 1]} : vector<16x544xf32> to vector<16x1xf32>
    %c336 = arith.constant 336 : index
    %c0_46 = arith.constant 0 : index
    %184 = vector.load %arg2[%c336, %c0_46] : memref<704x128xf32, #tpu.memory_space<vmem>>, vector<16x128xf32>
    %185 = vector.broadcast %183 : vector<16x1xf32> to vector<16x128xf32>
    %186 = arith.mulf %185, %184 : vector<16x128xf32>
    %cst_47 = arith.constant dense<0.000000e+00> : vector<128xf32>
    %187 = vector.multi_reduction <add>, %186, %cst_47 [0] : vector<16x128xf32> to vector<128xf32>
    %188 = vector.shape_cast %187 : vector<128xf32> to vector<1x128xf32>
    %189 = arith.addf %182, %188 : vector<1x128xf32>
    %190 = vector.extract_strided_slice %55 {offsets = [0, 400], sizes = [16, 1], strides = [1, 1]} : vector<16x544xf32> to vector<16x1xf32>
    %c352 = arith.constant 352 : index
    %c0_48 = arith.constant 0 : index
    %191 = vector.load %arg2[%c352, %c0_48] : memref<704x128xf32, #tpu.memory_space<vmem>>, vector<16x128xf32>
    %192 = vector.broadcast %190 : vector<16x1xf32> to vector<16x128xf32>
    %193 = arith.mulf %192, %191 : vector<16x128xf32>
    %cst_49 = arith.constant dense<0.000000e+00> : vector<128xf32>
    %194 = vector.multi_reduction <add>, %193, %cst_49 [0] : vector<16x128xf32> to vector<128xf32>
    %195 = vector.shape_cast %194 : vector<128xf32> to vector<1x128xf32>
    %196 = arith.addf %189, %195 : vector<1x128xf32>
    %197 = vector.extract_strided_slice %55 {offsets = [0, 512], sizes = [16, 1], strides = [1, 1]} : vector<16x544xf32> to vector<16x1xf32>
    %c368 = arith.constant 368 : index
    %c0_50 = arith.constant 0 : index
    %198 = vector.load %arg2[%c368, %c0_50] : memref<704x128xf32, #tpu.memory_space<vmem>>, vector<16x128xf32>
    %199 = vector.broadcast %197 : vector<16x1xf32> to vector<16x128xf32>
    %200 = arith.mulf %199, %198 : vector<16x128xf32>
    %cst_51 = arith.constant dense<0.000000e+00> : vector<128xf32>
    %201 = vector.multi_reduction <add>, %200, %cst_51 [0] : vector<16x128xf32> to vector<128xf32>
    %202 = vector.shape_cast %201 : vector<128xf32> to vector<1x128xf32>
    %203 = arith.addf %196, %202 : vector<1x128xf32>
    %204 = vector.extract_strided_slice %55 {offsets = [0, 516], sizes = [16, 1], strides = [1, 1]} : vector<16x544xf32> to vector<16x1xf32>
    %c384 = arith.constant 384 : index
    %c0_52 = arith.constant 0 : index
    %205 = vector.load %arg2[%c384, %c0_52] : memref<704x128xf32, #tpu.memory_space<vmem>>, vector<16x128xf32>
    %206 = vector.broadcast %204 : vector<16x1xf32> to vector<16x128xf32>
    %207 = arith.mulf %206, %205 : vector<16x128xf32>
    %cst_53 = arith.constant dense<0.000000e+00> : vector<128xf32>
    %208 = vector.multi_reduction <add>, %207, %cst_53 [0] : vector<16x128xf32> to vector<128xf32>
    %209 = vector.shape_cast %208 : vector<128xf32> to vector<1x128xf32>
    %210 = arith.addf %203, %209 : vector<1x128xf32>
    %211 = vector.extract_strided_slice %55 {offsets = [0, 520], sizes = [16, 1], strides = [1, 1]} : vector<16x544xf32> to vector<16x1xf32>
    %c400 = arith.constant 400 : index
    %c0_54 = arith.constant 0 : index
    %212 = vector.load %arg2[%c400, %c0_54] : memref<704x128xf32, #tpu.memory_space<vmem>>, vector<16x128xf32>
    %213 = vector.broadcast %211 : vector<16x1xf32> to vector<16x128xf32>
    %214 = arith.mulf %213, %212 : vector<16x128xf32>
    %cst_55 = arith.constant dense<0.000000e+00> : vector<128xf32>
    %215 = vector.multi_reduction <add>, %214, %cst_55 [0] : vector<16x128xf32> to vector<128xf32>
    %216 = vector.shape_cast %215 : vector<128xf32> to vector<1x128xf32>
    %217 = arith.addf %210, %216 : vector<1x128xf32>
    %218 = vector.extract_strided_slice %55 {offsets = [0, 524], sizes = [16, 1], strides = [1, 1]} : vector<16x544xf32> to vector<16x1xf32>
    %c416 = arith.constant 416 : index
    %c0_56 = arith.constant 0 : index
    %219 = vector.load %arg2[%c416, %c0_56] : memref<704x128xf32, #tpu.memory_space<vmem>>, vector<16x128xf32>
    %220 = vector.broadcast %218 : vector<16x1xf32> to vector<16x128xf32>
    %221 = arith.mulf %220, %219 : vector<16x128xf32>
    %cst_57 = arith.constant dense<0.000000e+00> : vector<128xf32>
    %222 = vector.multi_reduction <add>, %221, %cst_57 [0] : vector<16x128xf32> to vector<128xf32>
    %223 = vector.shape_cast %222 : vector<128xf32> to vector<1x128xf32>
    %224 = arith.addf %217, %223 : vector<1x128xf32>
    %225 = vector.extract_strided_slice %55 {offsets = [0, 528], sizes = [16, 1], strides = [1, 1]} : vector<16x544xf32> to vector<16x1xf32>
    %c432 = arith.constant 432 : index
    %c0_58 = arith.constant 0 : index
    %226 = vector.load %arg2[%c432, %c0_58] : memref<704x128xf32, #tpu.memory_space<vmem>>, vector<16x128xf32>
    %227 = vector.broadcast %225 : vector<16x1xf32> to vector<16x128xf32>
    %228 = arith.mulf %227, %226 : vector<16x128xf32>
    %cst_59 = arith.constant dense<0.000000e+00> : vector<128xf32>
    %229 = vector.multi_reduction <add>, %228, %cst_59 [0] : vector<16x128xf32> to vector<128xf32>
    %230 = vector.shape_cast %229 : vector<128xf32> to vector<1x128xf32>
    %231 = arith.addf %224, %230 : vector<1x128xf32>
    %cst_60 = arith.constant 0.000000e+00 : f32
    %232 = vector.broadcast %cst_60 : f32 to vector<1x128xf32>
    %233 = arith.maximumf %231, %232 : vector<1x128xf32>
    %c448 = arith.constant 448 : index
    %c0_61 = arith.constant 0 : index
    %234 = vector.load %arg2[%c448, %c0_61] : memref<704x128xf32, #tpu.memory_space<vmem>>, vector<128x128xf32>
    %cst_62 = arith.constant dense<0.000000e+00> : vector<1x128xf32>
    %235 = tpu.matmul %233, %234, %cst_62 {dimension_numbers = #tpu.dot_dimension_numbers<[1], [0], [0], [1], [0, 0, 1, 1], [], []>} : vector<1x128xf32>, vector<128x128xf32>, vector<1x128xf32> -> vector<1x128xf32>
    %c32 = arith.constant 32 : index
    %c0_63 = arith.constant 0 : index
    %236 = vector.load %arg2[%c32, %c0_63] : memref<704x128xf32, #tpu.memory_space<vmem>>, vector<1x128xf32>
    %237 = arith.addf %235, %236 : vector<1x128xf32>
    %cst_64 = arith.constant 0.000000e+00 : f32
    %238 = vector.broadcast %cst_64 : f32 to vector<1x128xf32>
    %239 = arith.maximumf %237, %238 : vector<1x128xf32>
    %c576 = arith.constant 576 : index
    %c0_65 = arith.constant 0 : index
    %240 = vector.load %arg2[%c576, %c0_65] : memref<704x128xf32, #tpu.memory_space<vmem>>, vector<128x128xf32>
    %cst_66 = arith.constant dense<0.000000e+00> : vector<1x128xf32>
    %241 = tpu.matmul %239, %240, %cst_66 {dimension_numbers = #tpu.dot_dimension_numbers<[1], [0], [0], [1], [0, 0, 1, 1], [], []>} : vector<1x128xf32>, vector<128x128xf32>, vector<1x128xf32> -> vector<1x128xf32>
    %c40 = arith.constant 40 : index
    %c0_67 = arith.constant 0 : index
    %242 = vector.load %arg2[%c40, %c0_67] : memref<704x128xf32, #tpu.memory_space<vmem>>, vector<1x128xf32>
    %243 = arith.addf %241, %242 : vector<1x128xf32>
    %c0_68 = arith.constant 0 : index
    %c0_69 = arith.constant 0 : index
    %244 = vector.load %arg3[%c0_68, %c0_69] : memref<1x128xf32, #tpu.memory_space<vmem>>, vector<1x128xf32>
    tpu.vector_store %arg3[%c0_68, %c0_69], %243 {strides = array<i32>} : memref<1x128xf32, #tpu.memory_space<vmem>>, vector<1x128xf32>,
    return
  }
}

</mosaic_0001>

<llo_original>
// kernel: net_forward.1
$region0: #{net_forward.1}
  #allocation0 [shape = 'u32[]', space=smem, size = 0x4, offset = 0x4, fixed_abs, tag = 'smem constant byte address 0x4 - core index']
  #allocation1 [shape = 'u32[144,128]{1,0:T(1,128)}', space=vmem, size = 0x12000, scoped, tag = 'internal scratch']
  %s0 = inlined_call_operand.vmem [shape: f32[32,1024], index: 0, kind: input, shape index: {}]
  %s1 = inlined_call_operand.vmem [shape: f32[16,200], index: 1, kind: input, shape index: {}]
  %s2 = inlined_call_operand.vmem [shape: f32[704,128], index: 2, kind: input, shape index: {}]
  %s3 = inlined_call_operand.hbm [shape: f32[1,128], index: 3, kind: output, shape index: {}]
  %s4 = sld [smem:[#allocation0]]
  $region22: #{net_forward.1} parent=0
    _
  %s6 = ssub.s32 1, %s4
  %s7 = scalar_select 0, %s6, %s4
  $region1: #{net_forward.1} parent=0
    #allocation2 [shape = 'u8[512]{0}', space=vmem, size = 0x400, scoped, tag = 'output window, operand 0, single buffered']
    #allocation3 [shape = 's32[1]{0}', space=sflag, size = 0x4, scoped, tag = 'scoped memory for net_forward.1']
    %8 = vsyncpa [#allocation3], 0
    // Predicated region
    $region2: #{net_forward.1} parent=1 // pred_check
      _
    $region3: #{net_forward.1} parent=1 // pred_check_branch
      %10 = sbr.rel (0) target = $region5
    $region4: #{net_forward.1} parent=1 // pred_region
      _
    $region5: #{net_forward.1} parent=1 // pred_fallthru
      _
    // Predicated region
    $region6: #{net_forward.1} parent=1 // pred_check
      _
    $region7: #{net_forward.1} parent=1 // pred_check_branch
      %12 = sbr.rel (0) target = $region9
    $region8: #{net_forward.1} parent=1 // pred_region
      _
    $region9: #{net_forward.1} parent=1 // pred_fallthru
      _
    // Predicated region
    $region10: #{net_forward.1} parent=1 // pred_check
      _
    $region11: #{net_forward.1} parent=1 // pred_check_branch
      %14 = sbr.rel (0) target = $region13
    $region12: #{net_forward.1} parent=1 // pred_region
      _
    $region13: #{net_forward.1} parent=1 // pred_fallthru
      _
    %v15 = vld [vmem:[%s2] sm:$0xff]
    %v16 = vld [vmem:[%s0] sm:$0xff]
    %v17 = vld [vmem:[%s0 + $0x8] sm:$0xff]
    %v18 = vld [vmem:[%s0 + $0x10] sm:$0xff]
    %v19 = vld [vmem:[%s0 + $0x18] sm:$0xff]
    %v20 = vld [vmem:[%s0 + $0x20] sm:$0xff]
    %v21 = vld [vmem:[%s0 + $0x28] sm:$0xff]
    %v22 = vld [vmem:[%s0 + $0x30] sm:$0xff]
    %v23 = vld [vmem:[%s0 + $0x38] sm:$0xff]
    %v24 = vld [vmem:[%s0 + $0x40] sm:$0xff]
    %v25 = vld [vmem:[%s0 + $0x48] sm:$0xff]
    %v26 = vld [vmem:[%s0 + $0x50] sm:$0xff]
    %v27 = vld [vmem:[%s0 + $0x58] sm:$0xff]
    %v28 = vld [vmem:[%s0 + $0x60] sm:$0xff]
    %v29 = vld [vmem:[%s0 + $0x68] sm:$0xff]
    %v30 = vld [vmem:[%s0 + $0x70] sm:$0xff]
    %v31 = vld [vmem:[%s0 + $0x78] sm:$0xff]
    %v32 = vld [vmem:[%s0 + $0x80] sm:$0xff]
    %v33 = vld [vmem:[%s0 + $0x88] sm:$0xff]
    %v34 = vld [vmem:[%s0 + $0x90] sm:$0xff]
    %v35 = vld [vmem:[%s0 + $0x98] sm:$0xff]
    %v36 = vld [vmem:[%s0 + $0xa0] sm:$0xff]
    %v37 = vld [vmem:[%s0 + $0xa8] sm:$0xff]
    %v38 = vld [vmem:[%s0 + $0xb0] sm:$0xff]
    %v39 = vld [vmem:[%s0 + $0xb8] sm:$0xff]
    %v40 = vld [vmem:[%s0 + $0xc0] sm:$0xff]
    %v41 = vld [vmem:[%s0 + $0xc8] sm:$0xff]
    %v42 = vld [vmem:[%s0 + $0xd0] sm:$0xff]
    %v43 = vld [vmem:[%s0 + $0xd8] sm:$0xff]
    %v44 = vld [vmem:[%s0 + $0xe0] sm:$0xff]
    %v45 = vld [vmem:[%s0 + $0xe8] sm:$0xff]
    %v46 = vld [vmem:[%s0 + $0xf0] sm:$0xff]
    %v47 = vld [vmem:[%s0 + $0xf8] sm:$0xff]
    %vm48 = vcmask 261120
    %v50 = vsel %vm48, %v15, 0
    %52 = vmatprep.subr.mxu0 %v17
    %53 = vmatpush1.msra.mxu0 %v16
    %54 = vmatprep.subr.mxu0 %v25
    %55 = vmatpush1.msra.mxu0 %v24
    %56 = vmatprep.subr.mxu0 %v33
    %57 = vmatpush1.msra.mxu0 %v32
    %58 = vmatprep.subr.mxu0 %v41
    %59 = vmatpush1.msra.mxu0 %v40
    %60 = vmatprep.subr.mxu0 0.0
    %61 = vmatpush1.msra.mxu0 0.0
    %62 = vmatprep.subr.mxu0 0.0
    %63 = vmatpush1.msra.mxu0 0.0
    %64 = vmatprep.subr.mxu0 0.0
    %65 = vmatpush1.msra.mxu0 0.0
    %66 = vmatprep.subr.mxu0 0.0
    %67 = vmatpush1.msra.mxu0 0.0
    %68 = vmatprep.subr.mxu0 0.0
    %69 = vmatpush1.msra.mxu0 0.0
    %70 = vmatprep.subr.mxu0 0.0
    %71 = vmatpush1.msra.mxu0 0.0
    %72 = vmatprep.subr.mxu0 0.0
    %73 = vmatpush1.msra.mxu0 0.0
    %74 = vmatprep.subr.mxu0 0.0
    %75 = vmatpush1.msra.mxu0 0.0
    %76 = vmatprep.subr.mxu0 0.0
    %77 = vmatpush1.msra.mxu0 0.0
    %78 = vmatprep.subr.mxu0 0.0
    %79 = vmatpush1.msra.mxu0 0.0
    %80 = vmatprep.subr.mxu0 0.0
    %81 = vmatpush1.msra.mxu0 0.0
    %82 = vmatprep.subr.mxu0 0.0
    %83 = vmatpush1.msra.mxu0 0.0
    %84 = vmatprep.subr.mxu0 0.0
    %85 = vmatpush1.msra.mxu0 0.0
    %86 = vmatprep.subr.mxu0 0.0
    %87 = vmatpush1.msra.mxu0 0.0
    %88 = vmatprep.subr.mxu0 0.0
    %89 = vmatpush1.msra.mxu0 0.0
    %90 = vmatprep.subr.mxu0 0.0
    %91 = vmatpush1.msra.mxu0 0.0
    %92 = vmatprep.subr.mxu0 0.0
    %93 = vmatpush1.msra.mxu0 0.0
    %94 = vmatprep.subr.mxu0 0.0
    %95 = vmatpush1.msra.mxu0 0.0
    %96 = vmatprep.subr.mxu0 0.0
    %97 = vmatpush1.msra.mxu0 0.0
    %98 = vmatprep.subr.mxu0 0.0
    %99 = vmatpush1.msra.mxu0 0.0
    %100 = vmatprep.subr.mxu0 0.0
    %101 = vmatpush1.msra.mxu0 0.0
    %102 = vmatprep.subr.mxu0 0.0
    %103 = vmatpush1.msra.mxu0 0.0
    %104 = vmatprep.subr.mxu0 0.0
    %105 = vmatpush1.msra.mxu0 0.0
    %106 = vmatprep.subr.mxu0 0.0
    %107 = vmatpush1.msra.mxu0 0.0
    %108 = vmatprep.subr.mxu0 0.0
    %109 = vmatpush1.msra.mxu0 0.0
    %110 = vmatprep.subr.mxu0 0.0
    %111 = vmatpush1.msra.mxu0 0.0
    %112 = vmatprep.subr.mxu0 0.0
    %113 = vmatpush1.msra.mxu0 0.0
    %114 = vmatprep.subr.mxu0 0.0
    %115 = vmatpush1.msra.mxu0 0.0
    %116 = vmatprep.mubr.f32.mxu0 0.0
    %117 = vmatmul.mubr.f32.gmra.mrb[0].mxu0 %v50
    %v118 = vpop.f32.mrb[0].mxu0
    %v119 = vadd.f32 0.0, %v118
    %v120 = vpop.f32.mrb[0].mxu0
    %v121 = vadd.f32 0.0, %v120
    %122 = vdwg.mxu0
    %123 = vmatprep.subr.mxu0 %v19
    %124 = vmatpush1.msra.mxu0 %v18
    %125 = vmatprep.subr.mxu0 %v27
    %126 = vmatpush1.msra.mxu0 %v26
    %127 = vmatprep.subr.mxu0 %v35
    %128 = vmatpush1.msra.mxu0 %v34
    %129 = vmatprep.subr.mxu0 %v43
    %130 = vmatpush1.msra.mxu0 %v42
    %131 = vmatprep.subr.mxu0 0.0
    %132 = vmatpush1.msra.mxu0 0.0
    %133 = vmatprep.subr.mxu0 0.0
    %134 = vmatpush1.msra.mxu0 0.0
    %135 = vmatprep.subr.mxu0 0.0
    %136 = vmatpush1.msra.mxu0 0.0
    %137 = vmatprep.subr.mxu0 0.0
    %138 = vmatpush1.msra.mxu0 0.0
    %139 = vmatprep.subr.mxu0 0.0
    %140 = vmatpush1.msra.mxu0 0.0
    %141 = vmatprep.subr.mxu0 0.0
    %142 = vmatpush1.msra.mxu0 0.0
    %143 = vmatprep.subr.mxu0 0.0
    %144 = vmatpush1.msra.mxu0 0.0
    %145 = vmatprep.subr.mxu0 0.0
    %146 = vmatpush1.msra.mxu0 0.0
    %147 = vmatprep.subr.mxu0 0.0
    %148 = vmatpush1.msra.mxu0 0.0
    %149 = vmatprep.subr.mxu0 0.0
    %150 = vmatpush1.msra.mxu0 0.0
    %151 = vmatprep.subr.mxu0 0.0
    %152 = vmatpush1.msra.mxu0 0.0
    %153 = vmatprep.subr.mxu0 0.0
    %154 = vmatpush1.msra.mxu0 0.0
    %155 = vmatprep.subr.mxu0 0.0
    %156 = vmatpush1.msra.mxu0 0.0
    %157 = vmatprep.subr.mxu0 0.0
    %158 = vmatpush1.msra.mxu0 0.0
    %159 = vmatprep.subr.mxu0 0.0
    %160 = vmatpush1.msra.mxu0 0.0
    %161 = vmatprep.subr.mxu0 0.0
    %162 = vmatpush1.msra.mxu0 0.0
    %163 = vmatprep.subr.mxu0 0.0
    %164 = vmatpush1.msra.mxu0 0.0
    %165 = vmatprep.subr.mxu0 0.0
    %166 = vmatpush1.msra.mxu0 0.0
    %167 = vmatprep.subr.mxu0 0.0
    %168 = vmatpush1.msra.mxu0 0.0
    %169 = vmatprep.subr.mxu0 0.0
    %170 = vmatpush1.msra.mxu0 0.0
    %171 = vmatprep.subr.mxu0 0.0
    %172 = vmatpush1.msra.mxu0 0.0
    %173 = vmatprep.subr.mxu0 0.0
    %174 = vmatpush1.msra.mxu0 0.0
    %175 = vmatprep.subr.mxu0 0.0
    %176 = vmatpush1.msra.mxu0 0.0
    %177 = vmatprep.subr.mxu0 0.0
    %178 = vmatpush1.msra.mxu0 0.0
    %179 = vmatprep.subr.mxu0 0.0
    %180 = vmatpush1.msra.mxu0 0.0
    %181 = vmatprep.subr.mxu0 0.0
    %182 = vmatpush1.msra.mxu0 0.0
    %183 = vmatprep.subr.mxu0 0.0
    %184 = vmatpush1.msra.mxu0 0.0
    %185 = vmatprep.subr.mxu0 0.0
    %186 = vmatpush1.msra.mxu0 0.0
    %187 = vmatprep.mubr.f32.mxu0 0.0
    %188 = vmatmul.mubr.f32.gmra.mrb[0].mxu0 %v50
    %v189 = vpop.f32.mrb[0].mxu0
    %v190 = vadd.f32 0.0, %v189
    %v191 = vpop.f32.mrb[0].mxu0
    %v192 = vadd.f32 0.0, %v191
    %193 = vdwg.mxu0
    %194 = vmatprep.subr.mxu0 %v21
    %195 = vmatpush1.msra.mxu0 %v20
    %196 = vmatprep.subr.mxu0 %v29
    %197 = vmatpush1.msra.mxu0 %v28
    %198 = vmatprep.subr.mxu0 %v37
    %199 = vmatpush1.msra.mxu0 %v36
    %200 = vmatprep.subr.mxu0 %v45
    %201 = vmatpush1.msra.mxu0 %v44
    %202 = vmatprep.subr.mxu0 0.0
    %203 = vmatpush1.msra.mxu0 0.0
    %204 = vmatprep.subr.mxu0 0.0
    %205 = vmatpush1.msra.mxu0 0.0
    %206 = vmatprep.subr.mxu0 0.0
    %207 = vmatpush1.msra.mxu0 0.0
    %208 = vmatprep.subr.mxu0 0.0
    %209 = vmatpush1.msra.mxu0 0.0
    %210 = vmatprep.subr.mxu0 0.0
    %211 = vmatpush1.msra.mxu0 0.0
    %212 = vmatprep.subr.mxu0 0.0
    %213 = vmatpush1.msra.mxu0 0.0
    %214 = vmatprep.subr.mxu0 0.0
    %215 = vmatpush1.msra.mxu0 0.0
    %216 = vmatprep.subr.mxu0 0.0
    %217 = vmatpush1.msra.mxu0 0.0
    %218 = vmatprep.subr.mxu0 0.0
    %219 = vmatpush1.msra.mxu0 0.0
    %220 = vmatprep.subr.mxu0 0.0
    %221 = vmatpush1.msra.mxu0 0.0
    %222 = vmatprep.subr.mxu0 0.0
    %223 = vmatpush1.msra.mxu0 0.0
    %224 = vmatprep.subr.mxu0 0.0
    %225 = vmatpush1.msra.mxu0 0.0
    %226 = vmatprep.subr.mxu0 0.0
    %227 = vmatpush1.msra.mxu0 0.0
    %228 = vmatprep.subr.mxu0 0.0
    %229 = vmatpush1.msra.mxu0 0.0
    %230 = vmatprep.subr.mxu0 0.0
    %231 = vmatpush1.msra.mxu0 0.0
    %232 = vmatprep.subr.mxu0 0.0
    %233 = vmatpush1.msra.mxu0 0.0
    %234 = vmatprep.subr.mxu0 0.0
    %235 = vmatpush1.msra.mxu0 0.0
    %236 = vmatprep.subr.mxu0 0.0
    %237 = vmatpush1.msra.mxu0 0.0
    %238 = vmatprep.subr.mxu0 0.0
    %239 = vmatpush1.msra.mxu0 0.0
    %240 = vmatprep.subr.mxu0 0.0
    %241 = vmatpush1.msra.mxu0 0.0
    %242 = vmatprep.subr.mxu0 0.0
    %243 = vmatpush1.msra.mxu0 0.0
    %244 = vmatprep.subr.mxu0 0.0
    %245 = vmatpush1.msra.mxu0 0.0
    %246 = vmatprep.subr.mxu0 0.0
    %247 = vmatpush1.msra.mxu0 0.0
    %248 = vmatprep.subr.mxu0 0.0
    %249 = vmatpush1.msra.mxu0 0.0
    %250 = vmatprep.subr.mxu0 0.0
    %251 = vmatpush1.msra.mxu0 0.0
    %252 = vmatprep.subr.mxu0 0.0
    %253 = vmatpush1.msra.mxu0 0.0
    %254 = vmatprep.subr.mxu0 0.0
    %255 = vmatpush1.msra.mxu0 0.0
    %256 = vmatprep.subr.mxu0 0.0
    %257 = vmatpush1.msra.mxu0 0.0
    %258 = vmatprep.mubr.f32.mxu0 0.0
    %259 = vmatmul.mubr.f32.gmra.mrb[0].mxu0 %v50
    %v260 = vpop.f32.mrb[0].mxu0
    %v261 = vadd.f32 0.0, %v260
    %v262 = vpop.f32.mrb[0].mxu0
    %v263 = vadd.f32 0.0, %v262
    %264 = vdwg.mxu0
    %265 = vmatprep.subr.mxu0 %v23
    %266 = vmatpush1.msra.mxu0 %v22
    %267 = vmatprep.subr.mxu0 %v31
    %268 = vmatpush1.msra.mxu0 %v30
    %269 = vmatprep.subr.mxu0 %v39
    %270 = vmatpush1.msra.mxu0 %v38
    %271 = vmatprep.subr.mxu0 %v47
    %272 = vmatpush1.msra.mxu0 %v46
    %273 = vmatprep.subr.mxu0 0.0
    %274 = vmatpush1.msra.mxu0 0.0
    %275 = vmatprep.subr.mxu0 0.0
    %276 = vmatpush1.msra.mxu0 0.0
    %277 = vmatprep.subr.mxu0 0.0
    %278 = vmatpush1.msra.mxu0 0.0
    %279 = vmatprep.subr.mxu0 0.0
    %280 = vmatpush1.msra.mxu0 0.0
    %281 = vmatprep.subr.mxu0 0.0
    %282 = vmatpush1.msra.mxu0 0.0
    %283 = vmatprep.subr.mxu0 0.0
    %284 = vmatpush1.msra.mxu0 0.0
    %285 = vmatprep.subr.mxu0 0.0
    %286 = vmatpush1.msra.mxu0 0.0
    %287 = vmatprep.subr.mxu0 0.0
    %288 = vmatpush1.msra.mxu0 0.0
    %289 = vmatprep.subr.mxu0 0.0
    %290 = vmatpush1.msra.mxu0 0.0
    %291 = vmatprep.subr.mxu0 0.0
    %292 = vmatpush1.msra.mxu0 0.0
    %293 = vmatprep.subr.mxu0 0.0
    %294 = vmatpush1.msra.mxu0 0.0
    %295 = vmatprep.subr.mxu0 0.0
    %296 = vmatpush1.msra.mxu0 0.0
    %297 = vmatprep.subr.mxu0 0.0
    %298 = vmatpush1.msra.mxu0 0.0
    %299 = vmatprep.subr.mxu0 0.0
    %300 = vmatpush1.msra.mxu0 0.0
    %301 = vmatprep.subr.mxu0 0.0
    %302 = vmatpush1.msra.mxu0 0.0
    %303 = vmatprep.subr.mxu0 0.0
    %304 = vmatpush1.msra.mxu0 0.0
    %305 = vmatprep.subr.mxu0 0.0
    %306 = vmatpush1.msra.mxu0 0.0
    %307 = vmatprep.subr.mxu0 0.0
    %308 = vmatpush1.msra.mxu0 0.0
    %309 = vmatprep.subr.mxu0 0.0
    %310 = vmatpush1.msra.mxu0 0.0
    %311 = vmatprep.subr.mxu0 0.0
    %312 = vmatpush1.msra.mxu0 0.0
    %313 = vmatprep.subr.mxu0 0.0
    %314 = vmatpush1.msra.mxu0 0.0
    %315 = vmatprep.subr.mxu0 0.0
    %316 = vmatpush1.msra.mxu0 0.0
    %317 = vmatprep.subr.mxu0 0.0
    %318 = vmatpush1.msra.mxu0 0.0
    %319 = vmatprep.subr.mxu0 0.0
    %320 = vmatpush1.msra.mxu0 0.0
    %321 = vmatprep.subr.mxu0 0.0
    %322 = vmatpush1.msra.mxu0 0.0
    %323 = vmatprep.subr.mxu0 0.0
    %324 = vmatpush1.msra.mxu0 0.0
    %325 = vmatprep.subr.mxu0 0.0
    %326 = vmatpush1.msra.mxu0 0.0
    %327 = vmatprep.subr.mxu0 0.0
    %328 = vmatpush1.msra.mxu0 0.0
    %329 = vmatprep.mubr.f32.mxu0 0.0
    %330 = vmatmul.mubr.f32.gmra.mrb[0].mxu0 %v50
    %v331 = vpop.f32.mrb[0].mxu0
    %v332 = vadd.f32 0.0, %v331
    %v333 = vpop.f32.mrb[0].mxu0
    %v334 = vadd.f32 0.0, %v333
    %335 = vdwg.mxu0
    %v336 = vmax.f32 %v119, 0.0
    %v337 = vmax.f32 %v121, 0.0
    %v338 = vmax.f32 %v190, 0.0
    %v339 = vmax.f32 %v192, 0.0
    %v340 = vmax.f32 %v261, 0.0
    %v341 = vmax.f32 %v263, 0.0
    %v342 = vmax.f32 %v332, 0.0
    %v343 = vmax.f32 %v334, 0.0
    %352 = vrot.lane.b32.xlu0 %v336, 127
    %v353 = vpop.permute.xlu0 %352
    %354 = vrot.lane.b32.xlu0 %v337, 127
    %v355 = vpop.permute.xlu0 %354
    %356 = vrot.lane.b32.xlu0 %v338, 127
    %v357 = vpop.permute.xlu0 %356
    %358 = vrot.lane.b32.xlu0 %v339, 127
    %v359 = vpop.permute.xlu0 %358
    %360 = vrot.lane.b32.xlu0 %v340, 127
    %v361 = vpop.permute.xlu0 %360
    %362 = vrot.lane.b32.xlu0 %v341, 127
    %v363 = vpop.permute.xlu0 %362
    %364 = vrot.lane.b32.xlu0 %v342, 127
    %v365 = vpop.permute.xlu0 %364
    %366 = vrot.lane.b32.xlu0 %v343, 127
    %v367 = vpop.permute.xlu0 %366
    %vm368 = vcmask 1039360
    %v369 = vsel %vm368, %v353, %v355
    %v370 = vsel %vm368, %v355, %v357
    %v371 = vsel %vm368, %v357, %v359
    %v372 = vsel %vm368, %v359, %v361
    %v373 = vsel %vm368, %v361, %v363
    %v374 = vsel %vm368, %v363, %v365
    %v375 = vsel %vm368, %v365, %v367
    %v384 = vmax.f32 %v336, %v369
    %v385 = vmax.f32 %v337, %v370
    %v386 = vmax.f32 %v338, %v371
    %v387 = vmax.f32 %v339, %v372
    %v388 = vmax.f32 %v340, %v373
    %v389 = vmax.f32 %v341, %v374
    %v390 = vmax.f32 %v342, %v375
    %v391 = vmax.f32 %v343, %v367
    %400 = vrot.lane.b32.xlu0 %v384, 96
    %v401 = vpop.permute.xlu0 %400
    %402 = vrot.lane.b32.xlu0 %v385, 96
    %v403 = vpop.permute.xlu0 %402
    %404 = vrot.lane.b32.xlu0 %v386, 96
    %v405 = vpop.permute.xlu0 %404
    %406 = vrot.lane.b32.xlu0 %v387, 96
    %v407 = vpop.permute.xlu0 %406
    %408 = vrot.lane.b32.xlu0 %v388, 96
    %v409 = vpop.permute.xlu0 %408
    %410 = vrot.lane.b32.xlu0 %v389, 96
    %v411 = vpop.permute.xlu0 %410
    %412 = vrot.lane.b32.xlu0 %v390, 96
    %v413 = vpop.permute.xlu0 %412
    %414 = vrot.lane.b32.xlu0 %v391, 96
    %v415 = vpop.permute.xlu0 %414
    %vm416 = vcmask 785408
    %v417 = vsel %vm416, %v401, %v403
    %v418 = vsel %vm416, %v403, %v405
    %v419 = vsel %vm416, %v405, %v407
    %v420 = vsel %vm416, %v407, %v409
    %v421 = vsel %vm416, %v409, %v411
    %v422 = vsel %vm416, %v411, %v413
    %v423 = vsel %vm416, %v413, %v415
    %v432 = vmax.f32 %v384, %v417
    %v433 = vmax.f32 %v385, %v418
    %v434 = vmax.f32 %v386, %v419
    %v435 = vmax.f32 %v387, %v420
    %v436 = vmax.f32 %v388, %v421
    %v437 = vmax.f32 %v389, %v422
    %v438 = vmax.f32 %v390, %v423
    %v439 = vmax.f32 %v391, %v415
    %446 = vrot.lane.b32.xlu0 %v432, 126
    %v447 = vpop.permute.xlu0 %446
    %448 = vrot.lane.b32.xlu0 %v433, 126
    %v449 = vpop.permute.xlu0 %448
    %450 = vrot.lane.b32.xlu0 %v434, 126
    %v451 = vpop.permute.xlu0 %450
    %452 = vrot.lane.b32.xlu0 %v435, 126
    %v453 = vpop.permute.xlu0 %452
    %454 = vrot.lane.b32.xlu0 %v436, 126
    %v455 = vpop.permute.xlu0 %454
    %456 = vrot.lane.b32.xlu0 %v437, 126
    %v457 = vpop.permute.xlu0 %456
    %vm458 = vcmask 1031168
    %v459 = vsel %vm458, %v447, %v449
    %v460 = vsel %vm458, %v449, %v451
    %v461 = vsel %vm458, %v451, %v453
    %v462 = vsel %vm458, %v453, %v455
    %v463 = vsel %vm458, %v455, %v457
    %469 = vrot.lane.b32.xlu0 %v432, 124
    %v470 = vpop.permute.xlu0 %469
    %471 = vrot.lane.b32.xlu0 %v433, 124
    %v472 = vpop.permute.xlu0 %471
    %473 = vrot.lane.b32.xlu0 %v434, 124
    %v474 = vpop.permute.xlu0 %473
    %475 = vrot.lane.b32.xlu0 %v435, 124
    %v476 = vpop.permute.xlu0 %475
    %477 = vrot.lane.b32.xlu0 %v436, 124
    %v478 = vpop.permute.xlu0 %477
    %479 = vrot.lane.b32.xlu0 %v437, 124
    %v480 = vpop.permute.xlu0 %479
    %vm481 = vcmask 1014784
    %v482 = vsel %vm481, %v470, %v472
    %v483 = vsel %vm481, %v472, %v474
    %v484 = vsel %vm481, %v474, %v476
    %v485 = vsel %vm481, %v476, %v478
    %v486 = vsel %vm481, %v478, %v480
    %492 = vrot.lane.b32.xlu0 %v432, 122
    %v493 = vpop.permute.xlu0 %492
    %494 = vrot.lane.b32.xlu0 %v433, 122
    %v495 = vpop.permute.xlu0 %494
    %496 = vrot.lane.b32.xlu0 %v434, 122
    %v497 = vpop.permute.xlu0 %496
    %498 = vrot.lane.b32.xlu0 %v435, 122
    %v499 = vpop.permute.xlu0 %498
    %500 = vrot.lane.b32.xlu0 %v436, 122
    %v501 = vpop.permute.xlu0 %500
    %502 = vrot.lane.b32.xlu0 %v437, 122
    %v503 = vpop.permute.xlu0 %502
    %vm504 = vcmask 998400
    %v505 = vsel %vm504, %v493, %v495
    %v506 = vsel %vm504, %v495, %v497
    %v507 = vsel %vm504, %v497, %v499
    %v508 = vsel %vm504, %v499, %v501
    %v509 = vsel %vm504, %v501, %v503
    %515 = vrot.lane.b32.xlu0 %v432, 120
    %v516 = vpop.permute.xlu0 %515
    %517 = vrot.lane.b32.xlu0 %v433, 120
    %v518 = vpop.permute.xlu0 %517
    %519 = vrot.lane.b32.xlu0 %v434, 120
    %v520 = vpop.permute.xlu0 %519
    %521 = vrot.lane.b32.xlu0 %v435, 120
    %v522 = vpop.permute.xlu0 %521
    %523 = vrot.lane.b32.xlu0 %v436, 120
    %v524 = vpop.permute.xlu0 %523
    %525 = vrot.lane.b32.xlu0 %v437, 120
    %v526 = vpop.permute.xlu0 %525
    %vm527 = vcmask 982016
    %v528 = vsel %vm527, %v516, %v518
    %v529 = vsel %vm527, %v518, %v520
    %v530 = vsel %vm527, %v520, %v522
    %v531 = vsel %vm527, %v522, %v524
    %v532 = vsel %vm527, %v524, %v526
    %538 = vrot.lane.b32.xlu0 %v432, 64
    %v539 = vpop.permute.xlu0 %538
    %540 = vrot.lane.b32.xlu0 %v433, 64
    %v541 = vpop.permute.xlu0 %540
    %542 = vrot.lane.b32.xlu0 %v434, 64
    %v543 = vpop.permute.xlu0 %542
    %544 = vrot.lane.b32.xlu0 %v435, 64
    %v545 = vpop.permute.xlu0 %544
    %546 = vrot.lane.b32.xlu0 %v436, 64
    %v547 = vpop.permute.xlu0 %546
    %548 = vrot.lane.b32.xlu0 %v437, 64
    %v549 = vpop.permute.xlu0 %548
    %vm550 = vcmask 523264
    %v551 = vsel %vm550, %v539, %v541
    %v552 = vsel %vm550, %v541, %v543
    %v553 = vsel %vm550, %v543, %v545
    %v554 = vsel %vm550, %v545, %v547
    %v555 = vsel %vm550, %v547, %v549
    %561 = vrot.lane.b32.xlu0 %v432, 62
    %v562 = vpop.permute.xlu0 %561
    %563 = vrot.lane.b32.xlu0 %v433, 62
    %v564 = vpop.permute.xlu0 %563
    %565 = vrot.lane.b32.xlu0 %v434, 62
    %v566 = vpop.permute.xlu0 %565
    %567 = vrot.lane.b32.xlu0 %v435, 62
    %v568 = vpop.permute.xlu0 %567
    %569 = vrot.lane.b32.xlu0 %v436, 62
    %v570 = vpop.permute.xlu0 %569
    %571 = vrot.lane.b32.xlu0 %v437, 62
    %v572 = vpop.permute.xlu0 %571
    %vm573 = vcmask 506880
    %v574 = vsel %vm573, %v562, %v564
    %v575 = vsel %vm573, %v564, %v566
    %v576 = vsel %vm573, %v566, %v568
    %v577 = vsel %vm573, %v568, %v570
    %v578 = vsel %vm573, %v570, %v572
    %584 = vrot.lane.b32.xlu0 %v432, 60
    %v585 = vpop.permute.xlu0 %584
    %586 = vrot.lane.b32.xlu0 %v433, 60
    %v587 = vpop.permute.xlu0 %586
    %588 = vrot.lane.b32.xlu0 %v434, 60
    %v589 = vpop.permute.xlu0 %588
    %590 = vrot.lane.b32.xlu0 %v435, 60
    %v591 = vpop.permute.xlu0 %590
    %592 = vrot.lane.b32.xlu0 %v436, 60
    %v593 = vpop.permute.xlu0 %592
    %594 = vrot.lane.b32.xlu0 %v437, 60
    %v595 = vpop.permute.xlu0 %594
    %vm596 = vcmask 490496
    %v597 = vsel %vm596, %v585, %v587
    %v598 = vsel %vm596, %v587, %v589
    %v599 = vsel %vm596, %v589, %v591
    %v600 = vsel %vm596, %v591, %v593
    %v601 = vsel %vm596, %v593, %v595
    %607 = vrot.lane.b32.xlu0 %v432, 58
    %v608 = vpop.permute.xlu0 %607
    %609 = vrot.lane.b32.xlu0 %v433, 58
    %v610 = vpop.permute.xlu0 %609
    %611 = vrot.lane.b32.xlu0 %v434, 58
    %v612 = vpop.permute.xlu0 %611
    %613 = vrot.lane.b32.xlu0 %v435, 58
    %v614 = vpop.permute.xlu0 %613
    %615 = vrot.lane.b32.xlu0 %v436, 58
    %v616 = vpop.permute.xlu0 %615
    %617 = vrot.lane.b32.xlu0 %v437, 58
    %v618 = vpop.permute.xlu0 %617
    %vm619 = vcmask 474112
    %v620 = vsel %vm619, %v608, %v610
    %v621 = vsel %vm619, %v610, %v612
    %v622 = vsel %vm619, %v612, %v614
    %v623 = vsel %vm619, %v614, %v616
    %v624 = vsel %vm619, %v616, %v618
    %630 = vrot.lane.b32.xlu0 %v432, 56
    %v631 = vpop.permute.xlu0 %630
    %632 = vrot.lane.b32.xlu0 %v433, 56
    %v633 = vpop.permute.xlu0 %632
    %634 = vrot.lane.b32.xlu0 %v434, 56
    %v635 = vpop.permute.xlu0 %634
    %636 = vrot.lane.b32.xlu0 %v435, 56
    %v637 = vpop.permute.xlu0 %636
    %638 = vrot.lane.b32.xlu0 %v436, 56
    %v639 = vpop.permute.xlu0 %638
    %640 = vrot.lane.b32.xlu0 %v437, 56
    %v641 = vpop.permute.xlu0 %640
    %vm642 = vcmask 457728
    %v643 = vsel %vm642, %v631, %v633
    %v644 = vsel %vm642, %v633, %v635
    %v645 = vsel %vm642, %v635, %v637
    %v646 = vsel %vm642, %v637, %v639
    %v647 = vsel %vm642, %v639, %v641
    %654 = vrot.lane.b32.xlu0 %v438, 126
    %v655 = vpop.permute.xlu0 %654
    %v656 = vsel %vm458, %v457, %v655
    %658 = vrot.lane.b32.xlu0 %v438, 124
    %v659 = vpop.permute.xlu0 %658
    %v660 = vsel %vm481, %v480, %v659
    %662 = vrot.lane.b32.xlu0 %v438, 122
    %v663 = vpop.permute.xlu0 %662
    %v664 = vsel %vm504, %v503, %v663
    %666 = vrot.lane.b32.xlu0 %v438, 120
    %v667 = vpop.permute.xlu0 %666
    %v668 = vsel %vm527, %v526, %v667
    %670 = vrot.lane.b32.xlu0 %v438, 64
    %v671 = vpop.permute.xlu0 %670
    %v672 = vsel %vm550, %v549, %v671
    %674 = vrot.lane.b32.xlu0 %v434, 66
    %v675 = vpop.permute.xlu0 %674
    %676 = vrot.lane.b32.xlu0 %v435, 66
    %v677 = vpop.permute.xlu0 %676
    %678 = vrot.lane.b32.xlu0 %v436, 66
    %v679 = vpop.permute.xlu0 %678
    %680 = vrot.lane.b32.xlu0 %v437, 66
    %v681 = vpop.permute.xlu0 %680
    %682 = vrot.lane.b32.xlu0 %v438, 66
    %v683 = vpop.permute.xlu0 %682
    %vm684 = vcmask 539648
    %v685 = vsel %vm684, %v675, %v677
    %v686 = vsel %vm684, %v677, %v679
    %v687 = vsel %vm684, %v679, %v681
    %v688 = vsel %vm684, %v681, %v683
    %690 = vrot.lane.b32.xlu0 %v439, 64
    %v691 = vpop.permute.xlu0 %690
    %v692 = vsel %vm550, %v671, %v691
    %693 = vrot.lane.b32.xlu0 %v438, 62
    %v694 = vpop.permute.xlu0 %693
    %695 = vrot.lane.b32.xlu0 %v439, 62
    %v696 = vpop.permute.xlu0 %695
    %v697 = vsel %vm573, %v572, %v694
    %v698 = vsel %vm573, %v694, %v696
    %699 = vrot.lane.b32.xlu0 %v438, 60
    %v700 = vpop.permute.xlu0 %699
    %701 = vrot.lane.b32.xlu0 %v439, 60
    %v702 = vpop.permute.xlu0 %701
    %v703 = vsel %vm596, %v595, %v700
    %v704 = vsel %vm596, %v700, %v702
    %705 = vrot.lane.b32.xlu0 %v438, 58
    %v706 = vpop.permute.xlu0 %705
    %707 = vrot.lane.b32.xlu0 %v439, 58
    %v708 = vpop.permute.xlu0 %707
    %v709 = vsel %vm619, %v618, %v706
    %v710 = vsel %vm619, %v706, %v708
    %711 = vrot.lane.b32.xlu0 %v460, 62
    %v712 = vpop.permute.xlu0 %711
    %713 = vrot.lane.b32.xlu0 %v461, 62
    %v714 = vpop.permute.xlu0 %713
    %715 = vrot.lane.b32.xlu0 %v462, 62
    %v716 = vpop.permute.xlu0 %715
    %717 = vrot.lane.b32.xlu0 %v463, 62
    %v718 = vpop.permute.xlu0 %717
    %719 = vrot.lane.b32.xlu0 %v656, 62
    %v720 = vpop.permute.xlu0 %719
    %721 = vrot.lane.b32.xlu0 %v655, 62
    %v722 = vpop.permute.xlu0 %721
    %723 = vrot.lane.b32.xlu0 %v483, 62
    %v724 = vpop.permute.xlu0 %723
    %725 = vrot.lane.b32.xlu0 %v484, 62
    %v726 = vpop.permute.xlu0 %725
    %727 = vrot.lane.b32.xlu0 %v485, 62
    %v728 = vpop.permute.xlu0 %727
    %729 = vrot.lane.b32.xlu0 %v486, 62
    %v730 = vpop.permute.xlu0 %729
    %731 = vrot.lane.b32.xlu0 %v660, 62
    %v732 = vpop.permute.xlu0 %731
    %733 = vrot.lane.b32.xlu0 %v659, 62
    %v734 = vpop.permute.xlu0 %733
    %735 = vrot.lane.b32.xlu0 %v506, 62
    %v736 = vpop.permute.xlu0 %735
    %737 = vrot.lane.b32.xlu0 %v507, 62
    %v738 = vpop.permute.xlu0 %737
    %739 = vrot.lane.b32.xlu0 %v508, 62
    %v740 = vpop.permute.xlu0 %739
    %741 = vrot.lane.b32.xlu0 %v509, 62
    %v742 = vpop.permute.xlu0 %741
    %743 = vrot.lane.b32.xlu0 %v664, 62
    %v744 = vpop.permute.xlu0 %743
    %745 = vrot.lane.b32.xlu0 %v663, 62
    %v746 = vpop.permute.xlu0 %745
    %747 = vrot.lane.b32.xlu0 %v675, 62
    %v748 = vpop.permute.xlu0 %747
    %749 = vrot.lane.b32.xlu0 %v685, 62
    %v750 = vpop.permute.xlu0 %749
    %751 = vrot.lane.b32.xlu0 %v686, 62
    %v752 = vpop.permute.xlu0 %751
    %753 = vrot.lane.b32.xlu0 %v687, 62
    %v754 = vpop.permute.xlu0 %753
    %755 = vrot.lane.b32.xlu0 %v688, 62
    %v756 = vpop.permute.xlu0 %755
    %757 = vrot.lane.b32.xlu0 %v683, 62
    %v758 = vpop.permute.xlu0 %757
    %759 = vrot.lane.b32.xlu0 %v543, 62
    %v760 = vpop.permute.xlu0 %759
    %761 = vrot.lane.b32.xlu0 %v553, 62
    %v762 = vpop.permute.xlu0 %761
    %763 = vrot.lane.b32.xlu0 %v554, 62
    %v764 = vpop.permute.xlu0 %763
    %765 = vrot.lane.b32.xlu0 %v555, 62
    %v766 = vpop.permute.xlu0 %765
    %767 = vrot.lane.b32.xlu0 %v672, 62
    %v768 = vpop.permute.xlu0 %767
    %769 = vrot.lane.b32.xlu0 %v692, 62
    %v770 = vpop.permute.xlu0 %769
    %771 = vrot.lane.b32.xlu0 %v566, 62
    %v772 = vpop.permute.xlu0 %771
    %773 = vrot.lane.b32.xlu0 %v576, 62
    %v774 = vpop.permute.xlu0 %773
    %775 = vrot.lane.b32.xlu0 %v577, 62
    %v776 = vpop.permute.xlu0 %775
    %777 = vrot.lane.b32.xlu0 %v578, 62
    %v778 = vpop.permute.xlu0 %777
    %779 = vrot.lane.b32.xlu0 %v697, 62
    %v780 = vpop.permute.xlu0 %779
    %781 = vrot.lane.b32.xlu0 %v698, 62
    %v782 = vpop.permute.xlu0 %781
    %783 = vrot.lane.b32.xlu0 %v589, 62
    %v784 = vpop.permute.xlu0 %783
    %785 = vrot.lane.b32.xlu0 %v599, 62
    %v786 = vpop.permute.xlu0 %785
    %787 = vrot.lane.b32.xlu0 %v600, 62
    %v788 = vpop.permute.xlu0 %787
    %789 = vrot.lane.b32.xlu0 %v601, 62
    %v790 = vpop.permute.xlu0 %789
    %791 = vrot.lane.b32.xlu0 %v703, 62
    %v792 = vpop.permute.xlu0 %791
    %793 = vrot.lane.b32.xlu0 %v704, 62
    %v794 = vpop.permute.xlu0 %793
    %795 = vrot.lane.b32.xlu0 %v612, 62
    %v796 = vpop.permute.xlu0 %795
    %797 = vrot.lane.b32.xlu0 %v622, 62
    %v798 = vpop.permute.xlu0 %797
    %799 = vrot.lane.b32.xlu0 %v623, 62
    %v800 = vpop.permute.xlu0 %799
    %801 = vrot.lane.b32.xlu0 %v624, 62
    %v802 = vpop.permute.xlu0 %801
    %803 = vrot.lane.b32.xlu0 %v709, 62
    %v804 = vpop.permute.xlu0 %803
    %805 = vrot.lane.b32.xlu0 %v710, 62
    %v806 = vpop.permute.xlu0 %805
    %v807 = vsel %vm573, %v712, %v714
    %v808 = vsel %vm573, %v714, %v716
    %v809 = vsel %vm573, %v716, %v718
    %v810 = vsel %vm573, %v718, %v720
    %v811 = vsel %vm573, %v720, %v722
    %v812 = vsel %vm573, %v724, %v726
    %v813 = vsel %vm573, %v726, %v728
    %v814 = vsel %vm573, %v728, %v730
    %v815 = vsel %vm573, %v730, %v732
    %v816 = vsel %vm573, %v732, %v734
    %v817 = vsel %vm573, %v736, %v738
    %v818 = vsel %vm573, %v738, %v740
    %v819 = vsel %vm573, %v740, %v742
    %v820 = vsel %vm573, %v742, %v744
    %v821 = vsel %vm573, %v744, %v746
    %v822 = vsel %vm573, %v748, %v750
    %v823 = vsel %vm573, %v750, %v752
    %v824 = vsel %vm573, %v752, %v754
    %v825 = vsel %vm573, %v754, %v756
    %v826 = vsel %vm573, %v756, %v758
    %v827 = vsel %vm573, %v760, %v762
    %v828 = vsel %vm573, %v762, %v764
    %v829 = vsel %vm573, %v764, %v766
    %v830 = vsel %vm573, %v766, %v768
    %v831 = vsel %vm573, %v768, %v770
    %v832 = vsel %vm573, %v772, %v774
    %v833 = vsel %vm573, %v774, %v776
    %v834 = vsel %vm573, %v776, %v778
    %v835 = vsel %vm573, %v778, %v780
    %v836 = vsel %vm573, %v780, %v782
    %v837 = vsel %vm573, %v784, %v786
    %v838 = vsel %vm573, %v786, %v788
    %v839 = vsel %vm573, %v788, %v790
    %v840 = vsel %vm573, %v790, %v792
    %v841 = vsel %vm573, %v792, %v794
    %v842 = vsel %vm573, %v796, %v798
    %v843 = vsel %vm573, %v798, %v800
    %v844 = vsel %vm573, %v800, %v802
    %v845 = vsel %vm573, %v802, %v804
    %v846 = vsel %vm573, %v804, %v806
    %v888 = vld [vmem:[%s2 + $0x8] sm:$0xff]
    %v889 = vld [vmem:[%s2 + $0x10] sm:$0xff]
    %v890 = vld [vmem:[%s1] sm:$0xff]
    %v891 = vld [vmem:[%s1 + $0x8] sm:$0xff]
    %v892 = vld [vmem:[%s1 + $0x10] sm:$0xff]
    %v893 = vld [vmem:[%s1 + $0x18] sm:$0xff]
    %895 = vset.pattern.permute.xlu0 0
    %896 = vperm.xlu0 %895, %v888
    %v897 = vpop.permute.xlu0 %896
    %900 = vset.pattern.permute.xlu0 0
    %901 = vperm.xlu0 %900, %v889
    %v902 = vpop.permute.xlu0 %901
    %vm904 = vcmask 588800
    %v906 = vsel %vm904, %v891, 0
    %v909 = vsel %vm904, %v893, 0
    %911 = vmatprep.subr.mxu0 %v433
    %912 = vmatpush1.msra.mxu0 %v432
    %913 = vmatprep.subr.mxu0 %v460
    %914 = vmatpush1.msra.mxu0 %v459
    %915 = vmatprep.subr.mxu0 %v483
    %916 = vmatpush1.msra.mxu0 %v482
    %917 = vmatprep.subr.mxu0 %v506
    %918 = vmatpush1.msra.mxu0 %v505
    %919 = vmatprep.subr.mxu0 %v529
    %920 = vmatpush1.msra.mxu0 %v528
    %921 = vmatprep.subr.mxu0 %v552
    %922 = vmatpush1.msra.mxu0 %v551
    %923 = vmatprep.subr.mxu0 %v575
    %924 = vmatpush1.msra.mxu0 %v574
    %925 = vmatprep.subr.mxu0 %v598
    %926 = vmatpush1.msra.mxu0 %v597
    %927 = vmatprep.subr.mxu0 %v621
    %928 = vmatpush1.msra.mxu0 %v620
    %929 = vmatprep.subr.mxu0 %v644
    %930 = vmatpush1.msra.mxu0 %v643
    %931 = vmatprep.subr.mxu0 %v434
    %932 = vmatpush1.msra.mxu0 %v433
    %933 = vmatprep.subr.mxu0 %v461
    %934 = vmatpush1.msra.mxu0 %v460
    %935 = vmatprep.subr.mxu0 %v484
    %936 = vmatpush1.msra.mxu0 %v483
    %937 = vmatprep.subr.mxu0 %v507
    %938 = vmatpush1.msra.mxu0 %v506
    %939 = vmatprep.subr.mxu0 %v530
    %940 = vmatpush1.msra.mxu0 %v529
    %941 = vmatprep.subr.mxu0 %v553
    %942 = vmatpush1.msra.mxu0 %v552
    %943 = vmatprep.subr.mxu0 %v576
    %944 = vmatpush1.msra.mxu0 %v575
    %945 = vmatprep.subr.mxu0 %v808
    %946 = vmatpush1.msra.mxu0 %v807
    %947 = vmatprep.subr.mxu0 %v813
    %948 = vmatpush1.msra.mxu0 %v812
    %949 = vmatprep.subr.mxu0 %v818
    %950 = vmatpush1.msra.mxu0 %v817
    %951 = vmatprep.subr.mxu0 %v823
    %952 = vmatpush1.msra.mxu0 %v822
    %953 = vmatprep.subr.mxu0 %v828
    %954 = vmatpush1.msra.mxu0 %v827
    %955 = vmatprep.subr.mxu0 %v833
    %956 = vmatpush1.msra.mxu0 %v832
    %957 = vmatprep.subr.mxu0 %v838
    %958 = vmatpush1.msra.mxu0 %v837
    %959 = vmatprep.subr.mxu0 %v843
    %960 = vmatpush1.msra.mxu0 %v842
    %961 = vmatprep.subr.mxu0 0.0
    %962 = vmatpush1.msra.mxu0 0.0
    %963 = vmatprep.subr.mxu0 0.0
    %964 = vmatpush1.msra.mxu0 0.0
    %965 = vmatprep.subr.mxu0 0.0
    %966 = vmatpush1.msra.mxu0 0.0
    %967 = vmatprep.subr.mxu0 0.0
    %968 = vmatpush1.msra.mxu0 0.0
    %969 = vmatprep.subr.mxu0 0.0
    %970 = vmatpush1.msra.mxu0 0.0
    %971 = vmatprep.subr.mxu0 0.0
    %972 = vmatpush1.msra.mxu0 0.0
    %973 = vmatprep.subr.mxu0 0.0
    %974 = vmatpush1.msra.mxu0 0.0
    %975 = vmatprep.mubr.f32.mxu0 %v906
    %976 = vmatmul.mubr.f32.gmra.mrb[0].mxu0 %v890
    %v977 = vpop.f32.mrb[0].mxu0
    %v978 = vadd.f32 %v897, %v977
    %v979 = vpop.f32.mrb[0].mxu0
    %v980 = vadd.f32 %v897, %v979
    %981 = vmatprep.mubr.f32.mxu0 %v909
    %982 = vmatmul.mubr.f32.gmra.mrb[0].mxu0 %v892
    %v983 = vpop.f32.mrb[0].mxu0
    %v984 = vadd.f32 %v902, %v983
    %v985 = vpop.f32.mrb[0].mxu0
    %v986 = vadd.f32 %v902, %v985
    %987 = vdwg.mxu0
    %988 = vmatprep.subr.mxu0 %v435
    %989 = vmatpush1.msra.mxu0 %v434
    %990 = vmatprep.subr.mxu0 %v462
    %991 = vmatpush1.msra.mxu0 %v461
    %992 = vmatprep.subr.mxu0 %v485
    %993 = vmatpush1.msra.mxu0 %v484
    %994 = vmatprep.subr.mxu0 %v508
    %995 = vmatpush1.msra.mxu0 %v507
    %996 = vmatprep.subr.mxu0 %v531
    %997 = vmatpush1.msra.mxu0 %v530
    %998 = vmatprep.subr.mxu0 %v554
    %999 = vmatpush1.msra.mxu0 %v553
    %1000 = vmatprep.subr.mxu0 %v577
    %1001 = vmatpush1.msra.mxu0 %v576
    %1002 = vmatprep.subr.mxu0 %v600
    %1003 = vmatpush1.msra.mxu0 %v599
    %1004 = vmatprep.subr.mxu0 %v623
    %1005 = vmatpush1.msra.mxu0 %v622
    %1006 = vmatprep.subr.mxu0 %v646
    %1007 = vmatpush1.msra.mxu0 %v645
    %1008 = vmatprep.subr.mxu0 %v436
    %1009 = vmatpush1.msra.mxu0 %v435
    %1010 = vmatprep.subr.mxu0 %v463
    %1011 = vmatpush1.msra.mxu0 %v462
    %1012 = vmatprep.subr.mxu0 %v486
    %1013 = vmatpush1.msra.mxu0 %v485
    %1014 = vmatprep.subr.mxu0 %v509
    %1015 = vmatpush1.msra.mxu0 %v508
    %1016 = vmatprep.subr.mxu0 %v532
    %1017 = vmatpush1.msra.mxu0 %v531
    %1018 = vmatprep.subr.mxu0 %v555
    %1019 = vmatpush1.msra.mxu0 %v554
    %1020 = vmatprep.subr.mxu0 %v578
    %1021 = vmatpush1.msra.mxu0 %v577
    %1022 = vmatprep.subr.mxu0 %v810
    %1023 = vmatpush1.msra.mxu0 %v809
    %1024 = vmatprep.subr.mxu0 %v815
    %1025 = vmatpush1.msra.mxu0 %v814
    %1026 = vmatprep.subr.mxu0 %v820
    %1027 = vmatpush1.msra.mxu0 %v819
    %1028 = vmatprep.subr.mxu0 %v825
    %1029 = vmatpush1.msra.mxu0 %v824
    %1030 = vmatprep.subr.mxu0 %v830
    %1031 = vmatpush1.msra.mxu0 %v829
    %1032 = vmatprep.subr.mxu0 %v835
    %1033 = vmatpush1.msra.mxu0 %v834
    %1034 = vmatprep.subr.mxu0 %v840
    %1035 = vmatpush1.msra.mxu0 %v839
    %1036 = vmatprep.subr.mxu0 %v845
    %1037 = vmatpush1.msra.mxu0 %v844
    %1038 = vmatprep.subr.mxu0 0.0
    %1039 = vmatpush1.msra.mxu0 0.0
    %1040 = vmatprep.subr.mxu0 0.0
    %1041 = vmatpush1.msra.mxu0 0.0
    %1042 = vmatprep.subr.mxu0 0.0
    %1043 = vmatpush1.msra.mxu0 0.0
    %1044 = vmatprep.subr.mxu0 0.0
    %1045 = vmatpush1.msra.mxu0 0.0
    %1046 = vmatprep.subr.mxu0 0.0
    %1047 = vmatpush1.msra.mxu0 0.0
    %1048 = vmatprep.subr.mxu0 0.0
    %1049 = vmatpush1.msra.mxu0 0.0
    %1050 = vmatprep.subr.mxu0 0.0
    %1051 = vmatpush1.msra.mxu0 0.0
    %1052 = vmatprep.mubr.f32.mxu0 %v906
    %1053 = vmatmul.mubr.f32.gmra.mrb[0].mxu0 %v890
    %v1054 = vpop.f32.mrb[0].mxu0
    %v1055 = vadd.f32 %v897, %v1054
    %v1056 = vpop.f32.mrb[0].mxu0
    %v1057 = vadd.f32 %v897, %v1056
    %1058 = vmatprep.mubr.f32.mxu0 %v909
    %1059 = vmatmul.mubr.f32.gmra.mrb[0].mxu0 %v892
    %v1060 = vpop.f32.mrb[0].mxu0
    %v1061 = vadd.f32 %v902, %v1060
    %v1062 = vpop.f32.mrb[0].mxu0
    %v1063 = vadd.f32 %v902, %v1062
    %1064 = vdwg.mxu0
    %1065 = vmatprep.subr.mxu0 0.0
    %1066 = vmatpush1.msra.mxu0 %v436
    %1067 = vmatprep.subr.mxu0 0.0
    %1068 = vmatpush1.msra.mxu0 %v463
    %1069 = vmatprep.subr.mxu0 0.0
    %1070 = vmatpush1.msra.mxu0 %v486
    %1071 = vmatprep.subr.mxu0 0.0
    %1072 = vmatpush1.msra.mxu0 %v509
    %1073 = vmatprep.subr.mxu0 0.0
    %1074 = vmatpush1.msra.mxu0 %v532
    %1075 = vmatprep.subr.mxu0 0.0
    %1076 = vmatpush1.msra.mxu0 %v555
    %1077 = vmatprep.subr.mxu0 0.0
    %1078 = vmatpush1.msra.mxu0 %v578
    %1079 = vmatprep.subr.mxu0 0.0
    %1080 = vmatpush1.msra.mxu0 %v601
    %1081 = vmatprep.subr.mxu0 0.0
    %1082 = vmatpush1.msra.mxu0 %v624
    %1083 = vmatprep.subr.mxu0 0.0
    %1084 = vmatpush1.msra.mxu0 %v647
    %1085 = vmatprep.subr.mxu0 0.0
    %1086 = vmatpush1.msra.mxu0 %v437
    %1087 = vmatprep.subr.mxu0 0.0
    %1088 = vmatpush1.msra.mxu0 %v656
    %1089 = vmatprep.subr.mxu0 0.0
    %1090 = vmatpush1.msra.mxu0 %v660
    %1091 = vmatprep.subr.mxu0 0.0
    %1092 = vmatpush1.msra.mxu0 %v664
    %1093 = vmatprep.subr.mxu0 0.0
    %1094 = vmatpush1.msra.mxu0 %v668
    %1095 = vmatprep.subr.mxu0 0.0
    %1096 = vmatpush1.msra.mxu0 %v672
    %1097 = vmatprep.subr.mxu0 0.0
    %1098 = vmatpush1.msra.mxu0 %v697
    %1099 = vmatprep.subr.mxu0 0.0
    %1100 = vmatpush1.msra.mxu0 %v811
    %1101 = vmatprep.subr.mxu0 0.0
    %1102 = vmatpush1.msra.mxu0 %v816
    %1103 = vmatprep.subr.mxu0 0.0
    %1104 = vmatpush1.msra.mxu0 %v821
    %1105 = vmatprep.subr.mxu0 0.0
    %1106 = vmatpush1.msra.mxu0 %v826
    %1107 = vmatprep.subr.mxu0 0.0
    %1108 = vmatpush1.msra.mxu0 %v831
    %1109 = vmatprep.subr.mxu0 0.0
    %1110 = vmatpush1.msra.mxu0 %v836
    %1111 = vmatprep.subr.mxu0 0.0
    %1112 = vmatpush1.msra.mxu0 %v841
    %1113 = vmatprep.subr.mxu0 0.0
    %1114 = vmatpush1.msra.mxu0 %v846
    %1115 = vmatprep.subr.mxu0 0.0
    %1116 = vmatpush1.msra.mxu0 0.0
    %1117 = vmatprep.subr.mxu0 0.0
    %1118 = vmatpush1.msra.mxu0 0.0
    %1119 = vmatprep.subr.mxu0 0.0
    %1120 = vmatpush1.msra.mxu0 0.0
    %1121 = vmatprep.subr.mxu0 0.0
    %1122 = vmatpush1.msra.mxu0 0.0
    %1123 = vmatprep.subr.mxu0 0.0
    %1124 = vmatpush1.msra.mxu0 0.0
    %1125 = vmatprep.subr.mxu0 0.0
    %1126 = vmatpush1.msra.mxu0 0.0
    %1127 = vmatprep.subr.mxu0 0.0
    %1128 = vmatpush1.msra.mxu0 0.0
    %1129 = vmatprep.mubr.f32.mxu0 %v906
    %1130 = vmatmul.mubr.f32.gmra.mrb[0].mxu0 %v890
    %v1131 = vpop.f32.mrb[0].mxu0
    %v1132 = vadd.f32 %v897, %v1131
    %v1133 = vpop.f32.mrb[0].mxu0
    %1134 = vmatprep.mubr.f32.mxu0 %v909
    %1135 = vmatmul.mubr.f32.gmra.mrb[0].mxu0 %v892
    %v1136 = vpop.f32.mrb[0].mxu0
    %v1137 = vadd.f32 %v902, %v1136
    %v1138 = vpop.f32.mrb[0].mxu0
    %1139 = vdwg.mxu0
    %v1140 = vmax.f32 %v978, 0.0
    %v1141 = vmax.f32 %v980, 0.0
    %v1142 = vmax.f32 %v1055, 0.0
    %v1143 = vmax.f32 %v1057, 0.0
    %v1144 = vmax.f32 %v1132, 0.0
    %v1145 = vmax.f32 %v984, 0.0
    %v1146 = vmax.f32 %v986, 0.0
    %v1147 = vmax.f32 %v1061, 0.0
    %v1148 = vmax.f32 %v1063, 0.0
    %v1149 = vmax.f32 %v1137, 0.0
    %1160 = vrot.lane.b32.xlu0 %v1140, 126
    %v1161 = vpop.permute.xlu0 %1160
    %1162 = vrot.lane.b32.xlu0 %v1141, 126
    %v1163 = vpop.permute.xlu0 %1162
    %1164 = vrot.lane.b32.xlu0 %v1142, 126
    %v1165 = vpop.permute.xlu0 %1164
    %1166 = vrot.lane.b32.xlu0 %v1143, 126
    %v1167 = vpop.permute.xlu0 %1166
    %1168 = vrot.lane.b32.xlu0 %v1144, 126
    %v1169 = vpop.permute.xlu0 %1168
    %1170 = vrot.lane.b32.xlu0 %v1145, 126
    %v1171 = vpop.permute.xlu0 %1170
    %1172 = vrot.lane.b32.xlu0 %v1146, 126
    %v1173 = vpop.permute.xlu0 %1172
    %1174 = vrot.lane.b32.xlu0 %v1147, 126
    %v1175 = vpop.permute.xlu0 %1174
    %1176 = vrot.lane.b32.xlu0 %v1148, 126
    %v1177 = vpop.permute.xlu0 %1176
    %1178 = vrot.lane.b32.xlu0 %v1149, 126
    %v1179 = vpop.permute.xlu0 %1178
    %v1180 = vsel %vm458, %v1161, %v1163
    %v1181 = vsel %vm458, %v1163, %v1165
    %v1182 = vsel %vm458, %v1165, %v1167
    %v1183 = vsel %vm458, %v1167, %v1169
    %v1184 = vsel %vm458, %v1171, %v1173
    %v1185 = vsel %vm458, %v1173, %v1175
    %v1186 = vsel %vm458, %v1175, %v1177
    %v1187 = vsel %vm458, %v1177, %v1179
    %v1198 = vmax.f32 %v1140, %v1180
    %v1199 = vmax.f32 %v1141, %v1181
    %v1200 = vmax.f32 %v1142, %v1182
    %v1201 = vmax.f32 %v1143, %v1183
    %v1202 = vmax.f32 %v1144, %v1169
    %v1203 = vmax.f32 %v1145, %v1184
    %v1204 = vmax.f32 %v1146, %v1185
    %v1205 = vmax.f32 %v1147, %v1186
    %v1206 = vmax.f32 %v1148, %v1187
    %v1207 = vmax.f32 %v1149, %v1179
    %1218 = vrot.lane.b32.xlu0 %v1198, 64
    %v1219 = vpop.permute.xlu0 %1218
    %1220 = vrot.lane.b32.xlu0 %v1199, 64
    %v1221 = vpop.permute.xlu0 %1220
    %1222 = vrot.lane.b32.xlu0 %v1200, 64
    %v1223 = vpop.permute.xlu0 %1222
    %1224 = vrot.lane.b32.xlu0 %v1201, 64
    %v1225 = vpop.permute.xlu0 %1224
    %1226 = vrot.lane.b32.xlu0 %v1202, 64
    %v1227 = vpop.permute.xlu0 %1226
    %1228 = vrot.lane.b32.xlu0 %v1203, 64
    %v1229 = vpop.permute.xlu0 %1228
    %1230 = vrot.lane.b32.xlu0 %v1204, 64
    %v1231 = vpop.permute.xlu0 %1230
    %1232 = vrot.lane.b32.xlu0 %v1205, 64
    %v1233 = vpop.permute.xlu0 %1232
    %1234 = vrot.lane.b32.xlu0 %v1206, 64
    %v1235 = vpop.permute.xlu0 %1234
    %1236 = vrot.lane.b32.xlu0 %v1207, 64
    %v1237 = vpop.permute.xlu0 %1236
    %v1238 = vsel %vm550, %v1219, %v1221
    %v1239 = vsel %vm550, %v1221, %v1223
    %v1240 = vsel %vm550, %v1223, %v1225
    %v1241 = vsel %vm550, %v1225, %v1227
    %v1242 = vsel %vm550, %v1229, %v1231
    %v1243 = vsel %vm550, %v1231, %v1233
    %v1244 = vsel %vm550, %v1233, %v1235
    %v1245 = vsel %vm550, %v1235, %v1237
    %v1256 = vmax.f32 %v1198, %v1238
    %v1257 = vmax.f32 %v1199, %v1239
    %v1258 = vmax.f32 %v1200, %v1240
    %v1259 = vmax.f32 %v1201, %v1241
    %v1260 = vmax.f32 %v1202, %v1227
    %v1261 = vmax.f32 %v1203, %v1242
    %v1262 = vmax.f32 %v1204, %v1243
    %v1263 = vmax.f32 %v1205, %v1244
    %v1264 = vmax.f32 %v1206, %v1245
    %v1265 = vmax.f32 %v1207, %v1237
    %v1266 = vld [vmem:[%s2 + $0x18] sm:$0x1]
    %v1267 = vld [vmem:[%s2 + $0x30] sm:$0xff]
    %v1268 = vld [vmem:[%s2 + $0x38] sm:$0xff]
    %1270 = vset.pattern.permute.xlu0 0
    %1271 = vperm.xlu0 %1270, %v1256
    %v1272 = vpop.permute.xlu0 %1271
    %1275 = vset.pattern.permute.xlu0 0
    %1276 = vperm.xlu0 %1275, %v1261
    %v1277 = vpop.permute.xlu0 %1276
    %v1279 = vmul.f32 %v1272, %v1267
    %v1280 = vmul.f32 %v1277, %v1268
    %v1281 = vadd.f32 %v1279, %v1280
    %v1282 = vrot.slane %v1281, 4
    %v1283 = vadd.f32 %v1281, %v1282
    %v1284 = vrot.slane %v1283, 2
    %v1285 = vadd.f32 %v1283, %v1284
    %v1286 = vrot.slane %v1285, 1
    %v1287 = vadd.f32 %v1285, %v1286
    %v1288 = vadd.f32 %v1266, %v1287
    %v1289 = vld [vmem:[%s2 + $0x40] sm:$0xff]
    %v1290 = vld [vmem:[%s2 + $0x48] sm:$0xff]
    %1291 = vset.pattern.permute.xlu0 4
    %1292 = vperm.xlu0 %1291, %v1256
    %v1293 = vpop.permute.xlu0 %1292
    %1295 = vset.pattern.permute.xlu0 4
    %1296 = vperm.xlu0 %1295, %v1261
    %v1297 = vpop.permute.xlu0 %1296
    %v1299 = vmul.f32 %v1293, %v1289
    %v1300 = vmul.f32 %v1297, %v1290
    %v1301 = vadd.f32 %v1299, %v1300
    %v1302 = vrot.slane %v1301, 4
    %v1303 = vadd.f32 %v1301, %v1302
    %v1304 = vrot.slane %v1303, 2
    %v1305 = vadd.f32 %v1303, %v1304
    %v1306 = vrot.slane %v1305, 1
    %v1307 = vadd.f32 %v1305, %v1306
    %v1308 = vadd.f32 %v1288, %v1307
    %v1309 = vld [vmem:[%s2 + $0x50] sm:$0xff]
    %v1310 = vld [vmem:[%s2 + $0x58] sm:$0xff]
    %1311 = vset.pattern.permute.xlu0 8
    %1312 = vperm.xlu0 %1311, %v1256
    %v1313 = vpop.permute.xlu0 %1312
    %1315 = vset.pattern.permute.xlu0 8
    %1316 = vperm.xlu0 %1315, %v1261
    %v1317 = vpop.permute.xlu0 %1316
    %v1319 = vmul.f32 %v1313, %v1309
    %v1320 = vmul.f32 %v1317, %v1310
    %v1321 = vadd.f32 %v1319, %v1320
    %v1322 = vrot.slane %v1321, 4
    %v1323 = vadd.f32 %v1321, %v1322
    %v1324 = vrot.slane %v1323, 2
    %v1325 = vadd.f32 %v1323, %v1324
    %v1326 = vrot.slane %v1325, 1
    %v1327 = vadd.f32 %v1325, %v1326
    %v1328 = vadd.f32 %v1308, %v1327
    %v1329 = vld [vmem:[%s2 + $0x60] sm:$0xff]
    %v1330 = vld [vmem:[%s2 + $0x68] sm:$0xff]
    %1331 = vset.pattern.permute.xlu0 12
    %1332 = vperm.xlu0 %1331, %v1256
    %v1333 = vpop.permute.xlu0 %1332
    %1335 = vset.pattern.permute.xlu0 12
    %1336 = vperm.xlu0 %1335, %v1261
    %v1337 = vpop.permute.xlu0 %1336
    %v1339 = vmul.f32 %v1333, %v1329
    %v1340 = vmul.f32 %v1337, %v1330
    %v1341 = vadd.f32 %v1339, %v1340
    %v1342 = vrot.slane %v1341, 4
    %v1343 = vadd.f32 %v1341, %v1342
    %v1344 = vrot.slane %v1343, 2
    %v1345 = vadd.f32 %v1343, %v1344
    %v1346 = vrot.slane %v1345, 1
    %v1347 = vadd.f32 %v1345, %v1346
    %v1348 = vadd.f32 %v1328, %v1347
    %v1349 = vld [vmem:[%s2 + $0x70] sm:$0xff]
    %v1350 = vld [vmem:[%s2 + $0x78] sm:$0xff]
    %1351 = vset.pattern.permute.xlu0 16
    %1352 = vperm.xlu0 %1351, %v1256
    %v1353 = vpop.permute.xlu0 %1352
    %1355 = vset.pattern.permute.xlu0 16
    %1356 = vperm.xlu0 %1355, %v1261
    %v1357 = vpop.permute.xlu0 %1356
    %v1359 = vmul.f32 %v1353, %v1349
    %v1360 = vmul.f32 %v1357, %v1350
    %v1361 = vadd.f32 %v1359, %v1360
    %v1362 = vrot.slane %v1361, 4
    %v1363 = vadd.f32 %v1361, %v1362
    %v1364 = vrot.slane %v1363, 2
    %v1365 = vadd.f32 %v1363, %v1364
    %v1366 = vrot.slane %v1365, 1
    %v1367 = vadd.f32 %v1365, %v1366
    %v1368 = vadd.f32 %v1348, %v1367
    %v1369 = vld [vmem:[%s2 + $0x80] sm:$0xff]
    %v1370 = vld [vmem:[%s2 + $0x88] sm:$0xff]
    %1372 = vset.pattern.permute.xlu0 0
    %1373 = vperm.xlu0 %1372, %v1257
    %v1374 = vpop.permute.xlu0 %1373
    %1377 = vset.pattern.permute.xlu0 0
    %1378 = vperm.xlu0 %1377, %v1262
    %v1379 = vpop.permute.xlu0 %1378
    %v1381 = vmul.f32 %v1374, %v1369
    %v1382 = vmul.f32 %v1379, %v1370
    %v1383 = vadd.f32 %v1381, %v1382
    %v1384 = vrot.slane %v1383, 4
    %v1385 = vadd.f32 %v1383, %v1384
    %v1386 = vrot.slane %v1385, 2
    %v1387 = vadd.f32 %v1385, %v1386
    %v1388 = vrot.slane %v1387, 1
    %v1389 = vadd.f32 %v1387, %v1388
    %v1390 = vadd.f32 %v1368, %v1389
    %v1391 = vld [vmem:[%s2 + $0x90] sm:$0xff]
    %v1392 = vld [vmem:[%s2 + $0x98] sm:$0xff]
    %1393 = vset.pattern.permute.xlu0 4
    %1394 = vperm.xlu0 %1393, %v1257
    %v1395 = vpop.permute.xlu0 %1394
    %1397 = vset.pattern.permute.xlu0 4
    %1398 = vperm.xlu0 %1397, %v1262
    %v1399 = vpop.permute.xlu0 %1398
    %v1401 = vmul.f32 %v1395, %v1391
    %v1402 = vmul.f32 %v1399, %v1392
    %v1403 = vadd.f32 %v1401, %v1402
    %v1404 = vrot.slane %v1403, 4
    %v1405 = vadd.f32 %v1403, %v1404
    %v1406 = vrot.slane %v1405, 2
    %v1407 = vadd.f32 %v1405, %v1406
    %v1408 = vrot.slane %v1407, 1
    %v1409 = vadd.f32 %v1407, %v1408
    %v1410 = vadd.f32 %v1390, %v1409
    %v1411 = vld [vmem:[%s2 + $0xa0] sm:$0xff]
    %v1412 = vld [vmem:[%s2 + $0xa8] sm:$0xff]
    %1413 = vset.pattern.permute.xlu0 8
    %1414 = vperm.xlu0 %1413, %v1257
    %v1415 = vpop.permute.xlu0 %1414
    %1417 = vset.pattern.permute.xlu0 8
    %1418 = vperm.xlu0 %1417, %v1262
    %v1419 = vpop.permute.xlu0 %1418
    %v1421 = vmul.f32 %v1415, %v1411
    %v1422 = vmul.f32 %v1419, %v1412
    %v1423 = vadd.f32 %v1421, %v1422
    %v1424 = vrot.slane %v1423, 4
    %v1425 = vadd.f32 %v1423, %v1424
    %v1426 = vrot.slane %v1425, 2
    %v1427 = vadd.f32 %v1425, %v1426
    %v1428 = vrot.slane %v1427, 1
    %v1429 = vadd.f32 %v1427, %v1428
    %v1430 = vadd.f32 %v1410, %v1429
    %v1431 = vld [vmem:[%s2 + $0xb0] sm:$0xff]
    %v1432 = vld [vmem:[%s2 + $0xb8] sm:$0xff]
    %1433 = vset.pattern.permute.xlu0 12
    %1434 = vperm.xlu0 %1433, %v1257
    %v1435 = vpop.permute.xlu0 %1434
    %1437 = vset.pattern.permute.xlu0 12
    %1438 = vperm.xlu0 %1437, %v1262
    %v1439 = vpop.permute.xlu0 %1438
    %v1441 = vmul.f32 %v1435, %v1431
    %v1442 = vmul.f32 %v1439, %v1432
    %v1443 = vadd.f32 %v1441, %v1442
    %v1444 = vrot.slane %v1443, 4
    %v1445 = vadd.f32 %v1443, %v1444
    %v1446 = vrot.slane %v1445, 2
    %v1447 = vadd.f32 %v1445, %v1446
    %v1448 = vrot.slane %v1447, 1
    %v1449 = vadd.f32 %v1447, %v1448
    %v1450 = vadd.f32 %v1430, %v1449
    %v1451 = vld [vmem:[%s2 + $0xc0] sm:$0xff]
    %v1452 = vld [vmem:[%s2 + $0xc8] sm:$0xff]
    %1453 = vset.pattern.permute.xlu0 16
    %1454 = vperm.xlu0 %1453, %v1257
    %v1455 = vpop.permute.xlu0 %1454
    %1457 = vset.pattern.permute.xlu0 16
    %1458 = vperm.xlu0 %1457, %v1262
    %v1459 = vpop.permute.xlu0 %1458
    %v1461 = vmul.f32 %v1455, %v1451
    %v1462 = vmul.f32 %v1459, %v1452
    %v1463 = vadd.f32 %v1461, %v1462
    %v1464 = vrot.slane %v1463, 4
    %v1465 = vadd.f32 %v1463, %v1464
    %v1466 = vrot.slane %v1465, 2
    %v1467 = vadd.f32 %v1465, %v1466
    %v1468 = vrot.slane %v1467, 1
    %v1469 = vadd.f32 %v1467, %v1468
    %v1470 = vadd.f32 %v1450, %v1469
    %v1471 = vld [vmem:[%s2 + $0xd0] sm:$0xff]
    %v1472 = vld [vmem:[%s2 + $0xd8] sm:$0xff]
    %1474 = vset.pattern.permute.xlu0 0
    %1475 = vperm.xlu0 %1474, %v1258
    %v1476 = vpop.permute.xlu0 %1475
    %1479 = vset.pattern.permute.xlu0 0
    %1480 = vperm.xlu0 %1479, %v1263
    %v1481 = vpop.permute.xlu0 %1480
    %v1483 = vmul.f32 %v1476, %v1471
    %v1484 = vmul.f32 %v1481, %v1472
    %v1485 = vadd.f32 %v1483, %v1484
    %v1486 = vrot.slane %v1485, 4
    %v1487 = vadd.f32 %v1485, %v1486
    %v1488 = vrot.slane %v1487, 2
    %v1489 = vadd.f32 %v1487, %v1488
    %v1490 = vrot.slane %v1489, 1
    %v1491 = vadd.f32 %v1489, %v1490
    %v1492 = vadd.f32 %v1470, %v1491
    %v1493 = vld [vmem:[%s2 + $0xe0] sm:$0xff]
    %v1494 = vld [vmem:[%s2 + $0xe8] sm:$0xff]
    %1495 = vset.pattern.permute.xlu0 4
    %1496 = vperm.xlu0 %1495, %v1258
    %v1497 = vpop.permute.xlu0 %1496
    %1499 = vset.pattern.permute.xlu0 4
    %1500 = vperm.xlu0 %1499, %v1263
    %v1501 = vpop.permute.xlu0 %1500
    %v1503 = vmul.f32 %v1497, %v1493
    %v1504 = vmul.f32 %v1501, %v1494
    %v1505 = vadd.f32 %v1503, %v1504
    %v1506 = vrot.slane %v1505, 4
    %v1507 = vadd.f32 %v1505, %v1506
    %v1508 = vrot.slane %v1507, 2
    %v1509 = vadd.f32 %v1507, %v1508
    %v1510 = vrot.slane %v1509, 1
    %v1511 = vadd.f32 %v1509, %v1510
    %v1512 = vadd.f32 %v1492, %v1511
    %v1513 = vld [vmem:[%s2 + $0xf0] sm:$0xff]
    %v1514 = vld [vmem:[%s2 + $0xf8] sm:$0xff]
    %1515 = vset.pattern.permute.xlu0 8
    %1516 = vperm.xlu0 %1515, %v1258
    %v1517 = vpop.permute.xlu0 %1516
    %1519 = vset.pattern.permute.xlu0 8
    %1520 = vperm.xlu0 %1519, %v1263
    %v1521 = vpop.permute.xlu0 %1520
    %v1523 = vmul.f32 %v1517, %v1513
    %v1524 = vmul.f32 %v1521, %v1514
    %v1525 = vadd.f32 %v1523, %v1524
    %v1526 = vrot.slane %v1525, 4
    %v1527 = vadd.f32 %v1525, %v1526
    %v1528 = vrot.slane %v1527, 2
    %v1529 = vadd.f32 %v1527, %v1528
    %v1530 = vrot.slane %v1529, 1
    %v1531 = vadd.f32 %v1529, %v1530
    %v1532 = vadd.f32 %v1512, %v1531
    %v1533 = vld [vmem:[%s2 + $0x100] sm:$0xff]
    %v1534 = vld [vmem:[%s2 + $0x108] sm:$0xff]
    %1535 = vset.pattern.permute.xlu0 12
    %1536 = vperm.xlu0 %1535, %v1258
    %v1537 = vpop.permute.xlu0 %1536
    %1539 = vset.pattern.permute.xlu0 12
    %1540 = vperm.xlu0 %1539, %v1263
    %v1541 = vpop.permute.xlu0 %1540
    %v1543 = vmul.f32 %v1537, %v1533
    %v1544 = vmul.f32 %v1541, %v1534
    %v1545 = vadd.f32 %v1543, %v1544
    %v1546 = vrot.slane %v1545, 4
    %v1547 = vadd.f32 %v1545, %v1546
    %v1548 = vrot.slane %v1547, 2
    %v1549 = vadd.f32 %v1547, %v1548
    %v1550 = vrot.slane %v1549, 1
    %v1551 = vadd.f32 %v1549, %v1550
    %v1552 = vadd.f32 %v1532, %v1551
    %v1553 = vld [vmem:[%s2 + $0x110] sm:$0xff]
    %v1554 = vld [vmem:[%s2 + $0x118] sm:$0xff]
    %1555 = vset.pattern.permute.xlu0 16
    %1556 = vperm.xlu0 %1555, %v1258
    %v1557 = vpop.permute.xlu0 %1556
    %1559 = vset.pattern.permute.xlu0 16
    %1560 = vperm.xlu0 %1559, %v1263
    %v1561 = vpop.permute.xlu0 %1560
    %v1563 = vmul.f32 %v1557, %v1553
    %v1564 = vmul.f32 %v1561, %v1554
    %v1565 = vadd.f32 %v1563, %v1564
    %v1566 = vrot.slane %v1565, 4
    %v1567 = vadd.f32 %v1565, %v1566
    %v1568 = vrot.slane %v1567, 2
    %v1569 = vadd.f32 %v1567, %v1568
    %v1570 = vrot.slane %v1569, 1
    %v1571 = vadd.f32 %v1569, %v1570
    %v1572 = vadd.f32 %v1552, %v1571
    %v1573 = vld [vmem:[%s2 + $0x120] sm:$0xff]
    %v1574 = vld [vmem:[%s2 + $0x128] sm:$0xff]
    %1576 = vset.pattern.permute.xlu0 0
    %1577 = vperm.xlu0 %1576, %v1259
    %v1578 = vpop.permute.xlu0 %1577
    %1581 = vset.pattern.permute.xlu0 0
    %1582 = vperm.xlu0 %1581, %v1264
    %v1583 = vpop.permute.xlu0 %1582
    %v1585 = vmul.f32 %v1578, %v1573
    %v1586 = vmul.f32 %v1583, %v1574
    %v1587 = vadd.f32 %v1585, %v1586
    %v1588 = vrot.slane %v1587, 4
    %v1589 = vadd.f32 %v1587, %v1588
    %v1590 = vrot.slane %v1589, 2
    %v1591 = vadd.f32 %v1589, %v1590
    %v1592 = vrot.slane %v1591, 1
    %v1593 = vadd.f32 %v1591, %v1592
    %v1594 = vadd.f32 %v1572, %v1593
    %v1595 = vld [vmem:[%s2 + $0x130] sm:$0xff]
    %v1596 = vld [vmem:[%s2 + $0x138] sm:$0xff]
    %1597 = vset.pattern.permute.xlu0 4
    %1598 = vperm.xlu0 %1597, %v1259
    %v1599 = vpop.permute.xlu0 %1598
    %1601 = vset.pattern.permute.xlu0 4
    %1602 = vperm.xlu0 %1601, %v1264
    %v1603 = vpop.permute.xlu0 %1602
    %v1605 = vmul.f32 %v1599, %v1595
    %v1606 = vmul.f32 %v1603, %v1596
    %v1607 = vadd.f32 %v1605, %v1606
    %v1608 = vrot.slane %v1607, 4
    %v1609 = vadd.f32 %v1607, %v1608
    %v1610 = vrot.slane %v1609, 2
    %v1611 = vadd.f32 %v1609, %v1610
    %v1612 = vrot.slane %v1611, 1
    %v1613 = vadd.f32 %v1611, %v1612
    %v1614 = vadd.f32 %v1594, %v1613
    %v1615 = vld [vmem:[%s2 + $0x140] sm:$0xff]
    %v1616 = vld [vmem:[%s2 + $0x148] sm:$0xff]
    %1617 = vset.pattern.permute.xlu0 8
    %1618 = vperm.xlu0 %1617, %v1259
    %v1619 = vpop.permute.xlu0 %1618
    %1621 = vset.pattern.permute.xlu0 8
    %1622 = vperm.xlu0 %1621, %v1264
    %v1623 = vpop.permute.xlu0 %1622
    %v1625 = vmul.f32 %v1619, %v1615
    %v1626 = vmul.f32 %v1623, %v1616
    %v1627 = vadd.f32 %v1625, %v1626
    %v1628 = vrot.slane %v1627, 4
    %v1629 = vadd.f32 %v1627, %v1628
    %v1630 = vrot.slane %v1629, 2
    %v1631 = vadd.f32 %v1629, %v1630
    %v1632 = vrot.slane %v1631, 1
    %v1633 = vadd.f32 %v1631, %v1632
    %v1634 = vadd.f32 %v1614, %v1633
    %v1635 = vld [vmem:[%s2 + $0x150] sm:$0xff]
    %v1636 = vld [vmem:[%s2 + $0x158] sm:$0xff]
    %1637 = vset.pattern.permute.xlu0 12
    %1638 = vperm.xlu0 %1637, %v1259
    %v1639 = vpop.permute.xlu0 %1638
    %1641 = vset.pattern.permute.xlu0 12
    %1642 = vperm.xlu0 %1641, %v1264
    %v1643 = vpop.permute.xlu0 %1642
    %v1645 = vmul.f32 %v1639, %v1635
    %v1646 = vmul.f32 %v1643, %v1636
    %v1647 = vadd.f32 %v1645, %v1646
    %v1648 = vrot.slane %v1647, 4
    %v1649 = vadd.f32 %v1647, %v1648
    %v1650 = vrot.slane %v1649, 2
    %v1651 = vadd.f32 %v1649, %v1650
    %v1652 = vrot.slane %v1651, 1
    %v1653 = vadd.f32 %v1651, %v1652
    %v1654 = vadd.f32 %v1634, %v1653
    %v1655 = vld [vmem:[%s2 + $0x160] sm:$0xff]
    %v1656 = vld [vmem:[%s2 + $0x168] sm:$0xff]
    %1657 = vset.pattern.permute.xlu0 16
    %1658 = vperm.xlu0 %1657, %v1259
    %v1659 = vpop.permute.xlu0 %1658
    %1661 = vset.pattern.permute.xlu0 16
    %1662 = vperm.xlu0 %1661, %v1264
    %v1663 = vpop.permute.xlu0 %1662
    %v1665 = vmul.f32 %v1659, %v1655
    %v1666 = vmul.f32 %v1663, %v1656
    %v1667 = vadd.f32 %v1665, %v1666
    %v1668 = vrot.slane %v1667, 4
    %v1669 = vadd.f32 %v1667, %v1668
    %v1670 = vrot.slane %v1669, 2
    %v1671 = vadd.f32 %v1669, %v1670
    %v1672 = vrot.slane %v1671, 1
    %v1673 = vadd.f32 %v1671, %v1672
    %v1674 = vadd.f32 %v1654, %v1673
    %v1675 = vld [vmem:[%s2 + $0x170] sm:$0xff]
    %v1676 = vld [vmem:[%s2 + $0x178] sm:$0xff]
    %1678 = vset.pattern.permute.xlu0 0
    %1679 = vperm.xlu0 %1678, %v1260
    %v1680 = vpop.permute.xlu0 %1679
    %1683 = vset.pattern.permute.xlu0 0
    %1684 = vperm.xlu0 %1683, %v1265
    %v1685 = vpop.permute.xlu0 %1684
    %v1687 = vmul.f32 %v1680, %v1675
    %v1688 = vmul.f32 %v1685, %v1676
    %v1689 = vadd.f32 %v1687, %v1688
    %v1690 = vrot.slane %v1689, 4
    %v1691 = vadd.f32 %v1689, %v1690
    %v1692 = vrot.slane %v1691, 2
    %v1693 = vadd.f32 %v1691, %v1692
    %v1694 = vrot.slane %v1693, 1
    %v1695 = vadd.f32 %v1693, %v1694
    %v1696 = vadd.f32 %v1674, %v1695
    %v1697 = vld [vmem:[%s2 + $0x180] sm:$0xff]
    %v1698 = vld [vmem:[%s2 + $0x188] sm:$0xff]
    %1699 = vset.pattern.permute.xlu0 4
    %1700 = vperm.xlu0 %1699, %v1260
    %v1701 = vpop.permute.xlu0 %1700
    %1703 = vset.pattern.permute.xlu0 4
    %1704 = vperm.xlu0 %1703, %v1265
    %v1705 = vpop.permute.xlu0 %1704
    %v1707 = vmul.f32 %v1701, %v1697
    %v1708 = vmul.f32 %v1705, %v1698
    %v1709 = vadd.f32 %v1707, %v1708
    %v1710 = vrot.slane %v1709, 4
    %v1711 = vadd.f32 %v1709, %v1710
    %v1712 = vrot.slane %v1711, 2
    %v1713 = vadd.f32 %v1711, %v1712
    %v1714 = vrot.slane %v1713, 1
    %v1715 = vadd.f32 %v1713, %v1714
    %v1716 = vadd.f32 %v1696, %v1715
    %v1717 = vld [vmem:[%s2 + $0x190] sm:$0xff]
    %v1718 = vld [vmem:[%s2 + $0x198] sm:$0xff]
    %1719 = vset.pattern.permute.xlu0 8
    %1720 = vperm.xlu0 %1719, %v1260
    %v1721 = vpop.permute.xlu0 %1720
    %1723 = vset.pattern.permute.xlu0 8
    %1724 = vperm.xlu0 %1723, %v1265
    %v1725 = vpop.permute.xlu0 %1724
    %v1727 = vmul.f32 %v1721, %v1717
    %v1728 = vmul.f32 %v1725, %v1718
    %v1729 = vadd.f32 %v1727, %v1728
    %v1730 = vrot.slane %v1729, 4
    %v1731 = vadd.f32 %v1729, %v1730
    %v1732 = vrot.slane %v1731, 2
    %v1733 = vadd.f32 %v1731, %v1732
    %v1734 = vrot.slane %v1733, 1
    %v1735 = vadd.f32 %v1733, %v1734
    %v1736 = vadd.f32 %v1716, %v1735
    %v1737 = vld [vmem:[%s2 + $0x1a0] sm:$0xff]
    %v1738 = vld [vmem:[%s2 + $0x1a8] sm:$0xff]
    %1739 = vset.pattern.permute.xlu0 12
    %1740 = vperm.xlu0 %1739, %v1260
    %v1741 = vpop.permute.xlu0 %1740
    %1743 = vset.pattern.permute.xlu0 12
    %1744 = vperm.xlu0 %1743, %v1265
    %v1745 = vpop.permute.xlu0 %1744
    %v1747 = vmul.f32 %v1741, %v1737
    %v1748 = vmul.f32 %v1745, %v1738
    %v1749 = vadd.f32 %v1747, %v1748
    %v1750 = vrot.slane %v1749, 4
    %v1751 = vadd.f32 %v1749, %v1750
    %v1752 = vrot.slane %v1751, 2
    %v1753 = vadd.f32 %v1751, %v1752
    %v1754 = vrot.slane %v1753, 1
    %v1755 = vadd.f32 %v1753, %v1754
    %v1756 = vadd.f32 %v1736, %v1755
    %v1757 = vld [vmem:[%s2 + $0x1b0] sm:$0xff]
    %v1758 = vld [vmem:[%s2 + $0x1b8] sm:$0xff]
    %1759 = vset.pattern.permute.xlu0 16
    %1760 = vperm.xlu0 %1759, %v1260
    %v1761 = vpop.permute.xlu0 %1760
    %1763 = vset.pattern.permute.xlu0 16
    %1764 = vperm.xlu0 %1763, %v1265
    %v1765 = vpop.permute.xlu0 %1764
    %v1767 = vmul.f32 %v1761, %v1757
    %v1768 = vmul.f32 %v1765, %v1758
    %v1769 = vadd.f32 %v1767, %v1768
    %v1770 = vrot.slane %v1769, 4
    %v1771 = vadd.f32 %v1769, %v1770
    %v1772 = vrot.slane %v1771, 2
    %v1773 = vadd.f32 %v1771, %v1772
    %v1774 = vrot.slane %v1773, 1
    %v1775 = vadd.f32 %v1773, %v1774
    %v1776 = vadd.f32 %v1756, %v1775
    %v1777 = vmax.f32 %v1776, 0.0
    %v1778 = vld [vmem:[%s2 + $0x1c0] sm:$0xff]
    %v1779 = vld [vmem:[%s2 + $0x1c8] sm:$0xff]
    %v1780 = vld [vmem:[%s2 + $0x1d0] sm:$0xff]
    %v1781 = vld [vmem:[%s2 + $0x1d8] sm:$0xff]
    %v1782 = vld [vmem:[%s2 + $0x1e0] sm:$0xff]
    %v1783 = vld [vmem:[%s2 + $0x1e8] sm:$0xff]
    %v1784 = vld [vmem:[%s2 + $0x1f0] sm:$0xff]
    %v1785 = vld [vmem:[%s2 + $0x1f8] sm:$0xff]
    %v1786 = vld [vmem:[%s2 + $0x200] sm:$0xff]
    %v1787 = vld [vmem:[%s2 + $0x208] sm:$0xff]
    %v1788 = vld [vmem:[%s2 + $0x210] sm:$0xff]
    %v1789 = vld [vmem:[%s2 + $0x218] sm:$0xff]
    %v1790 = vld [vmem:[%s2 + $0x220] sm:$0xff]
    %v1791 = vld [vmem:[%s2 + $0x228] sm:$0xff]
    %v1792 = vld [vmem:[%s2 + $0x230] sm:$0xff]
    %v1793 = vld [vmem:[%s2 + $0x238] sm:$0xff]
    %v1794 = vld [vmem:[%s2 + $0x20] sm:$0x1]
    %1795 = vmatprep.subr.mxu0 0.0
    %1796 = vmatpush1.msra.mxu0 %v1778
    %1797 = vmatprep.subr.mxu0 0.0
    %1798 = vmatpush1.msra.mxu0 %v1779
    %1799 = vmatprep.subr.mxu0 0.0
    %1800 = vmatpush1.msra.mxu0 %v1780
    %1801 = vmatprep.subr.mxu0 0.0
    %1802 = vmatpush1.msra.mxu0 %v1781
    %1803 = vmatprep.subr.mxu0 0.0
    %1804 = vmatpush1.msra.mxu0 %v1782
    %1805 = vmatprep.subr.mxu0 0.0
    %1806 = vmatpush1.msra.mxu0 %v1783
    %1807 = vmatprep.subr.mxu0 0.0
    %1808 = vmatpush1.msra.mxu0 %v1784
    %1809 = vmatprep.subr.mxu0 0.0
    %1810 = vmatpush1.msra.mxu0 %v1785
    %1811 = vmatprep.subr.mxu0 0.0
    %1812 = vmatpush1.msra.mxu0 %v1786
    %1813 = vmatprep.subr.mxu0 0.0
    %1814 = vmatpush1.msra.mxu0 %v1787
    %1815 = vmatprep.subr.mxu0 0.0
    %1816 = vmatpush1.msra.mxu0 %v1788
    %1817 = vmatprep.subr.mxu0 0.0
    %1818 = vmatpush1.msra.mxu0 %v1789
    %1819 = vmatprep.subr.mxu0 0.0
    %1820 = vmatpush1.msra.mxu0 %v1790
    %1821 = vmatprep.subr.mxu0 0.0
    %1822 = vmatpush1.msra.mxu0 %v1791
    %1823 = vmatprep.subr.mxu0 0.0
    %1824 = vmatpush1.msra.mxu0 %v1792
    %1825 = vmatprep.subr.mxu0 0.0
    %1826 = vmatpush1.msra.mxu0 %v1793
    %1827 = vmatprep.subr.mxu0 0.0
    %1828 = vmatpush1.msra.mxu0 0.0
    %1829 = vmatprep.subr.mxu0 0.0
    %1830 = vmatpush1.msra.mxu0 0.0
    %1831 = vmatprep.subr.mxu0 0.0
    %1832 = vmatpush1.msra.mxu0 0.0
    %1833 = vmatprep.subr.mxu0 0.0
    %1834 = vmatpush1.msra.mxu0 0.0
    %1835 = vmatprep.subr.mxu0 0.0
    %1836 = vmatpush1.msra.mxu0 0.0
    %1837 = vmatprep.subr.mxu0 0.0
    %1838 = vmatpush1.msra.mxu0 0.0
    %1839 = vmatprep.subr.mxu0 0.0
    %1840 = vmatpush1.msra.mxu0 0.0
    %1841 = vmatprep.subr.mxu0 0.0
    %1842 = vmatpush1.msra.mxu0 0.0
    %1843 = vmatprep.subr.mxu0 0.0
    %1844 = vmatpush1.msra.mxu0 0.0
    %1845 = vmatprep.subr.mxu0 0.0
    %1846 = vmatpush1.msra.mxu0 0.0
    %1847 = vmatprep.subr.mxu0 0.0
    %1848 = vmatpush1.msra.mxu0 0.0
    %1849 = vmatprep.subr.mxu0 0.0
    %1850 = vmatpush1.msra.mxu0 0.0
    %1851 = vmatprep.subr.mxu0 0.0
    %1852 = vmatpush1.msra.mxu0 0.0
    %1853 = vmatprep.subr.mxu0 0.0
    %1854 = vmatpush1.msra.mxu0 0.0
    %1855 = vmatprep.subr.mxu0 0.0
    %1856 = vmatpush1.msra.mxu0 0.0
    %1857 = vmatprep.subr.mxu0 0.0
    %1858 = vmatpush1.msra.mxu0 0.0
    %1859 = vmatprep.mubr.f32.mxu0 0.0
    %1860 = vmatmul.mubr.f32.gmra.mrb[0].mxu0 %v1777
    %v1861 = vpop.f32.mrb[0].mxu0
    %v1862 = vadd.f32 %v1794, %v1861
    %v1863 = vpop.f32.mrb[0].mxu0
    %1864 = vdwg.mxu0
    %v1865 = vmax.f32 %v1862, 0.0
    %v1866 = vld [vmem:[%s2 + $0x240] sm:$0xff]
    %v1867 = vld [vmem:[%s2 + $0x248] sm:$0xff]
    %v1868 = vld [vmem:[%s2 + $0x250] sm:$0xff]
    %v1869 = vld [vmem:[%s2 + $0x258] sm:$0xff]
    %v1870 = vld [vmem:[%s2 + $0x260] sm:$0xff]
    %v1871 = vld [vmem:[%s2 + $0x268] sm:$0xff]
    %v1872 = vld [vmem:[%s2 + $0x270] sm:$0xff]
    %v1873 = vld [vmem:[%s2 + $0x278] sm:$0xff]
    %v1874 = vld [vmem:[%s2 + $0x280] sm:$0xff]
    %v1875 = vld [vmem:[%s2 + $0x288] sm:$0xff]
    %v1876 = vld [vmem:[%s2 + $0x290] sm:$0xff]
    %v1877 = vld [vmem:[%s2 + $0x298] sm:$0xff]
    %v1878 = vld [vmem:[%s2 + $0x2a0] sm:$0xff]
    %v1879 = vld [vmem:[%s2 + $0x2a8] sm:$0xff]
    %v1880 = vld [vmem:[%s2 + $0x2b0] sm:$0xff]
    %v1881 = vld [vmem:[%s2 + $0x2b8] sm:$0xff]
    %v1882 = vld [vmem:[%s2 + $0x28] sm:$0x1]
    %1883 = vmatprep.subr.mxu0 0.0
    %1884 = vmatpush1.msra.mxu0 %v1866
    %1885 = vmatprep.subr.mxu0 0.0
    %1886 = vmatpush1.msra.mxu0 %v1867
    %1887 = vmatprep.subr.mxu0 0.0
    %1888 = vmatpush1.msra.mxu0 %v1868
    %1889 = vmatprep.subr.mxu0 0.0
    %1890 = vmatpush1.msra.mxu0 %v1869
    %1891 = vmatprep.subr.mxu0 0.0
    %1892 = vmatpush1.msra.mxu0 %v1870
    %1893 = vmatprep.subr.mxu0 0.0
    %1894 = vmatpush1.msra.mxu0 %v1871
    %1895 = vmatprep.subr.mxu0 0.0
    %1896 = vmatpush1.msra.mxu0 %v1872
    %1897 = vmatprep.subr.mxu0 0.0
    %1898 = vmatpush1.msra.mxu0 %v1873
    %1899 = vmatprep.subr.mxu0 0.0
    %1900 = vmatpush1.msra.mxu0 %v1874
    %1901 = vmatprep.subr.mxu0 0.0
    %1902 = vmatpush1.msra.mxu0 %v1875
    %1903 = vmatprep.subr.mxu0 0.0
    %1904 = vmatpush1.msra.mxu0 %v1876
    %1905 = vmatprep.subr.mxu0 0.0
    %1906 = vmatpush1.msra.mxu0 %v1877
    %1907 = vmatprep.subr.mxu0 0.0
    %1908 = vmatpush1.msra.mxu0 %v1878
    %1909 = vmatprep.subr.mxu0 0.0
    %1910 = vmatpush1.msra.mxu0 %v1879
    %1911 = vmatprep.subr.mxu0 0.0
    %1912 = vmatpush1.msra.mxu0 %v1880
    %1913 = vmatprep.subr.mxu0 0.0
    %1914 = vmatpush1.msra.mxu0 %v1881
    %1915 = vmatprep.subr.mxu0 0.0
    %1916 = vmatpush1.msra.mxu0 0.0
    %1917 = vmatprep.subr.mxu0 0.0
    %1918 = vmatpush1.msra.mxu0 0.0
    %1919 = vmatprep.subr.mxu0 0.0
    %1920 = vmatpush1.msra.mxu0 0.0
    %1921 = vmatprep.subr.mxu0 0.0
    %1922 = vmatpush1.msra.mxu0 0.0
    %1923 = vmatprep.subr.mxu0 0.0
    %1924 = vmatpush1.msra.mxu0 0.0
    %1925 = vmatprep.subr.mxu0 0.0
    %1926 = vmatpush1.msra.mxu0 0.0
    %1927 = vmatprep.subr.mxu0 0.0
    %1928 = vmatpush1.msra.mxu0 0.0
    %1929 = vmatprep.subr.mxu0 0.0
    %1930 = vmatpush1.msra.mxu0 0.0
    %1931 = vmatprep.subr.mxu0 0.0
    %1932 = vmatpush1.msra.mxu0 0.0
    %1933 = vmatprep.subr.mxu0 0.0
    %1934 = vmatpush1.msra.mxu0 0.0
    %1935 = vmatprep.subr.mxu0 0.0
    %1936 = vmatpush1.msra.mxu0 0.0
    %1937 = vmatprep.subr.mxu0 0.0
    %1938 = vmatpush1.msra.mxu0 0.0
    %1939 = vmatprep.subr.mxu0 0.0
    %1940 = vmatpush1.msra.mxu0 0.0
    %1941 = vmatprep.subr.mxu0 0.0
    %1942 = vmatpush1.msra.mxu0 0.0
    %1943 = vmatprep.subr.mxu0 0.0
    %1944 = vmatpush1.msra.mxu0 0.0
    %1945 = vmatprep.subr.mxu0 0.0
    %1946 = vmatpush1.msra.mxu0 0.0
    %1947 = vmatprep.mubr.f32.mxu0 0.0
    %1948 = vmatmul.mubr.f32.gmra.mrb[0].mxu0 %v1865
    %v1949 = vpop.f32.mrb[0].mxu0
    %v1950 = vadd.f32 %v1882, %v1949
    %v1951 = vpop.f32.mrb[0].mxu0
    %1952 = vdwg.mxu0
    %1953 = vst [vmem:[#allocation2] sm:$0x1] %v1950
    // Predicated region
    $region14: #{net_forward.1} parent=1 // pred_check
      _
    $region15: #{net_forward.1} parent=1 // pred_check_branch
      %1955 = sbr.rel (0) target = $region17
    $region16: #{net_forward.1} parent=1 // pred_region
      %s1957 = ssub.s32 16, 16
      %1958 = vsyncadd [#allocation3], %s1957
      %s1960 = sshll.u32 [#allocation2], 4
      %s1961 = int_to_ptr.vmem [resolvable:$true] %s1960
      %1963 = dma.vmem_to_hbm [thread:$0]  %s1961, 16, %s3, [#allocation3]
    $region17: #{net_forward.1} parent=1 // pred_fallthru
      _
    // Predicated region
    $region18: #{net_forward.1} parent=1 // pred_check
      _
    $region19: #{net_forward.1} parent=1 // pred_check_branch
      %1965 = sbr.rel (0) target = $region21
    $region20: #{net_forward.1} parent=1 // pred_region
      %1966 = dma.done [#allocation3], 16
    $region21: #{net_forward.1} parent=1 // pred_fallthru
      _
    %1967 = vsyncpa [#allocation3], 1

</llo_original>
